<compile_context>
chip_gen: v7x
topology: tpu7x:2x2x1
jax: 0.10.0
libtpu: 0.0.40
codegen_flags: <defaults>
</compile_context>

<pallas_src>
import math

import jax
import jax.numpy as jnp
from jax import lax
from jax.experimental import pallas as pl
from jax.experimental.pallas import tpu as pltpu

LANE = 128
SUBLANE = 8


def _round_up(n: int, m: int) -> int:
    return ((n + m - 1) // m) * m


# ---------------------------------------------------------------------------
# Kernel factory: one batch tile through the full AE; final layer fused w/ MSE
# ---------------------------------------------------------------------------
def _make_ae_kernel(n_layers: int, true_d: int, d_pad: int, chunk: int):
    inv_n = 1.0 / float(true_d)
    # Output-feature chunks of the final decoder layer (all multiples of 128).
    chunks = [(lo, min(chunk, d_pad - lo)) for lo in range(0, d_pad, chunk)]
    n_param_refs = 2 * n_layers

    def kernel(x_ref, *refs):
        out_ref = refs[n_param_refs]
        p = refs[:n_param_refs]

        # ---- Encoder + decoder hidden layers: bf16 activations, tanh-sigmoid ----
        h = x_ref[...].astype(jnp.bfloat16)
        for l in range(n_layers - 1):
            w_ref, b_ref = p[2 * l], p[2 * l + 1]
            y = jnp.dot(h, w_ref[...], preferred_element_type=jnp.float32)
            y = (y + b_ref[...]).astype(jnp.bfloat16)
            # sigmoid(y) == 0.5 * tanh(0.5 * y) + 0.5   (single EUP push)
            h = jnp.tanh(y * 0.5) * 0.5 + 0.5

        # ---- Final decoder layer, chunked over output features, fused MSE ----
        w_ref, b_ref = p[2 * (n_layers - 1)], p[2 * (n_layers - 1) + 1]
        acc = jnp.zeros((x_ref.shape[0], 1), jnp.float32)
        for lo, cs in chunks:
            y = jnp.dot(h, w_ref[:, lo:lo + cs],
                        preferred_element_type=jnp.float32)
            y = y + b_ref[:, lo:lo + cs]
            recon = jnp.tanh(y * 0.5) * 0.5 + 0.5            # f32 sigmoid
            err = recon - x_ref[:, lo:lo + cs]               # x block is f32
            if lo + cs > true_d:
                # Mask the zero-padded feature lanes out of the reduction.
                lane = lo + lax.broadcasted_iota(jnp.int32, err.shape, 1)
                err = jnp.where(lane < true_d, err, 0.0)
            acc = acc + jnp.sum(err * err, axis=1, keepdims=True)

        out_ref[...] = acc * inv_n                           # mean over true_d

    return kernel


# ---------------------------------------------------------------------------
# Wrapper: batch tiling, VMEM-aware tile sizing, padding, lane-aligned output
# ---------------------------------------------------------------------------
def ae_forward(x, prepared_params, *, tb=512):
    """AE forward. x: (B, input_size) -> (B,) per-sample reconstruction error."""
    B, D = x.shape
    n_layers = len(prepared_params)
    flat_params = [a for wb in prepared_params for a in wb]
    d_pad = prepared_params[0][0].shape[0]
    assert d_pad == _round_up(D, LANE), "params prepared for a different input_size"

    # ---------------- batch-tile selection ----------------
    tb = _round_up(min(tb, max(B, SUBLANE)), SUBLANE)
    if B > SUBLANE and B <= tb:
        # Split into >=2 tiles so the "parallel" batch axis keeps both v7x
        # TensorCores busy (no effect on single-TC v5e/v6e).
        tb = _round_up(-(-B // 2), SUBLANE)

    chunk = min(d_pad, 4 * LANE)
    max_w = max(max(w.shape[1] for w, _ in prepared_params), d_pad)
    param_bytes = sum(int(a.size) * a.dtype.itemsize for a in flat_params)

    def est_vmem(t):
        x_blocks = 2 * t * d_pad * 4                  # double-buffered f32 x tile
        out_blocks = 2 * t * 4                        # (t, 1) f32 output tile
        live = t * (2 * d_pad                         # bf16 copy of x
                    + 3 * 2 * max_w                   # bf16 hidden activations
                    + 3 * 4 * chunk)                  # f32 recon/err chunk temps
        return x_blocks + out_blocks + 2 * param_bytes + live + (2 << 20)

    try:
        hw_vmem = int(pltpu.get_tpu_info().vmem_capacity_bytes)
    except Exception:
        hw_vmem = 64 * 1024 * 1024                    # conservative: v7x per-core VMEM
    budget = min(int(hw_vmem * 0.75), 100 * 1024 * 1024)   # ~96-100MiB v5e/v6e, ~48MiB v7x
    while tb > SUBLANE and est_vmem(tb) > budget:
        tb -= SUBLANE
    vmem_limit = int(min(max(est_vmem(tb), 32 * 1024 * 1024), budget))

    B_pad = _round_up(B, tb)
    num_tiles = B_pad // tb

    # ---------------- pad the input ----------------
    xp = x.astype(jnp.float32)                        # input_tensor.float()
    if (B_pad, d_pad) != (B, D):
        xp = jnp.pad(xp, ((0, B_pad - B), (0, d_pad - D)))

    kernel = _make_ae_kernel(n_layers, D, d_pad, chunk)

    def build(param_pipeline_mode):
        x_spec = pl.BlockSpec((tb, d_pad), lambda i: (i, 0))
        if param_pipeline_mode is None:
            resident = lambda a: pl.BlockSpec(a.shape, lambda i: (0, 0))
        else:
            # Grid-invariant params only need a single VMEM buffer.
            resident = lambda a: pl.BlockSpec(a.shape, lambda i: (0, 0),
                                              pipeline_mode=param_pipeline_mode)
        return pl.pallas_call(
            kernel,
            out_shape=jax.ShapeDtypeStruct((B_pad, 1), jnp.float32),
            grid=(num_tiles,),
            in_specs=[x_spec] + [resident(a) for a in flat_params],
            out_specs=pl.BlockSpec((tb, 1), lambda i: (i, 0)),
            compiler_params=pltpu.CompilerParams(
                dimension_semantics=("parallel",),    # megacore sharding on v7x
                vmem_limit_bytes=vmem_limit,
            ),
        )

    try:
        out = build(pl.Buffered(1))(xp, *flat_params)
    except Exception:
        # Fallback if this Pallas version rejects single-buffer pipeline_mode.
        out = build(None)(xp, *flat_params)

    return out[:B, 0]


# ---------------------------------------------------------------------------
# Parameter init (mirrors nn.Linear default init) + kernel-side preparation
# ---------------------------------------------------------------------------
def init_ae_params(key, input_size, hidden_dims, latent_dim):
    """nn.Linear-style init; returns unpadded f32 [(w (in,out), b (out,)), ...]."""
    enc = [input_size] + list(hidden_dims) + [latent_dim]
    dec = [latent_dim] + list(hidden_dims) + [input_size]
    dims = list(zip(enc[:-1], enc[1:])) + list(zip(dec[:-1], dec[1:]))
    params = []
    for in_dim, out_dim in dims:
        key, kw, kb = jax.random.split(key, 3)
        bound = 1.0 / math.sqrt(in_dim)
        w = jax.random.uniform(kw, (in_dim, out_dim), jnp.float32, -bound, bound)
        b = jax.random.uniform(kb, (out_dim,), jnp.float32, -bound, bound)
        params.append((w, b))
    return params


def prepare_ae_params(raw_params):
    """Zero-pad every layer dim to a multiple of 128 and cast weights to bf16.

    Padded rows/cols are zero, so they contribute exactly nothing to any dot
    product; padded output lanes of the final layer are masked in the kernel.
    """
    prepared = []
    for w, b in raw_params:
        i, o = w.shape
        ip, op = _round_up(i, LANE), _round_up(o, LANE)
        wp = jnp.zeros((ip, op), jnp.bfloat16).at[:i, :o].set(w.astype(jnp.bfloat16))
        bp = jnp.zeros((1, op), jnp.float32).at[0, :o].set(b)
        prepared.append((wp, bp))
    return prepared


# ---------------------------------------------------------------------------
# References
# ---------------------------------------------------------------------------
def ae_forward_ref(x, prepared_params):
    """Pure-JAX reference with the same padded / bf16 / tanh-sigmoid numerics."""
    B, D = x.shape
    d_pad = prepared_params[0][0].shape[0]
    xp = jnp.pad(x.astype(jnp.float32), ((0, 0), (0, d_pad - D)))
    h = xp.astype(jnp.bfloat16)
    for w, b in prepared_params[:-1]:
        y = jnp.dot(h, w, preferred_element_type=jnp.float32)
        y = (y + b).astype(jnp.bfloat16)
        h = jnp.tanh(y * 0.5) * 0.5 + 0.5
    w, b = prepared_params[-1]
    y = jnp.dot(h, w, preferred_element_type=jnp.float32) + b
    recon = jnp.tanh(y * 0.5) * 0.5 + 0.5
    err = jnp.where(jnp.arange(d_pad)[None, :] < D, recon - xp, 0.0)
    return jnp.sum(err * err, axis=1) / D


def ae_forward_f32_ref(x, raw_params):
    """Plain f32 reference mirroring the PyTorch module (unpadded weights)."""
    xf = x.astype(jnp.float32)
    h = xf
    for w, b in raw_params:
        h = jax.nn.sigmoid(h @ w + b)
    return jnp.mean((h - xf) ** 2, axis=1)


if __name__ == "__main__":
    # Small shapes: batch=20, input_size=16, hidden_dims=[32, 24], latent_dim=8
    batch, input_size, hidden_dims, latent_dim = 20, 16, [32, 24], 8

    key = jax.random.PRNGKey(0)
    key_x, key_p = jax.random.split(key)
    x = jax.random.normal(key_x, (batch, input_size), jnp.float32)

    raw_params = init_ae_params(key_p, input_size, hidden_dims, latent_dim)
    params = prepare_ae_params(raw_params)

    out = jax.block_until_ready(ae_forward(x, params))
    assert out.shape == (batch,), out.shape

    # Tight check vs a pure-JAX reference with identical (padded / bf16) numerics.
    ref = ae_forward_ref(x, params)
    assert jnp.allclose(out, ref, atol=1e-3, rtol=1e-3), (out, ref)

    # Loose sanity check vs the f32 PyTorch-style forward (bf16 weights documented).
    ref32 = ae_forward_f32_ref(x, raw_params)
    assert jnp.allclose(out, ref32, atol=5e-2, rtol=5e-2), (out, ref32)

    print("KERNEL_OK")
</pallas_src>

<mosaic_0001>
module attributes {stable_mosaic.version = 11 : i64} {
  func.func @kernel(%arg0: i32, %arg1: memref<16x128xf32, #tpu.memory_space<vmem>>, %arg2: memref<128x128xbf16, #tpu.memory_space<vmem>>, %arg3: memref<1x128xf32, #tpu.memory_space<vmem>>, %arg4: memref<128x128xbf16, #tpu.memory_space<vmem>>, %arg5: memref<1x128xf32, #tpu.memory_space<vmem>>, %arg6: memref<128x128xbf16, #tpu.memory_space<vmem>>, %arg7: memref<1x128xf32, #tpu.memory_space<vmem>>, %arg8: memref<128x128xbf16, #tpu.memory_space<vmem>>, %arg9: memref<1x128xf32, #tpu.memory_space<vmem>>, %arg10: memref<128x128xbf16, #tpu.memory_space<vmem>>, %arg11: memref<1x128xf32, #tpu.memory_space<vmem>>, %arg12: memref<128x128xbf16, #tpu.memory_space<vmem>>, %arg13: memref<1x128xf32, #tpu.memory_space<vmem>>, %arg14: memref<16x1xf32, #tpu.memory_space<vmem>>) attributes {dimension_semantics = [#tpu.dimension_semantics<parallel>], iteration_bounds = array<i64: 2>, scalar_prefetch = 0 : i64, scratch_operands = 0 : i64, tpu.core_type = #tpu.core_type<tc>, window_params = [{transform_indices = @transform_0, window_bounds = array<i64: 16, 128>}, {pipeline_mode = #tpu.pipeline_mode<synchronous>, transform_indices = @transform_1, window_bounds = array<i64: 128, 128>}, {pipeline_mode = #tpu.pipeline_mode<synchronous>, transform_indices = @transform_2, window_bounds = array<i64: 1, 128>}, {pipeline_mode = #tpu.pipeline_mode<synchronous>, transform_indices = @transform_3, window_bounds = array<i64: 128, 128>}, {pipeline_mode = #tpu.pipeline_mode<synchronous>, transform_indices = @transform_4, window_bounds = array<i64: 1, 128>}, {pipeline_mode = #tpu.pipeline_mode<synchronous>, transform_indices = @transform_5, window_bounds = array<i64: 128, 128>}, {pipeline_mode = #tpu.pipeline_mode<synchronous>, transform_indices = @transform_6, window_bounds = array<i64: 1, 128>}, {pipeline_mode = #tpu.pipeline_mode<synchronous>, transform_indices = @transform_7, window_bounds = array<i64: 128, 128>}, {pipeline_mode = #tpu.pipeline_mode<synchronous>, transform_indices = @transform_8, window_bounds = array<i64: 1, 128>}, {pipeline_mode = #tpu.pipeline_mode<synchronous>, transform_indices = @transform_9, window_bounds = array<i64: 128, 128>}, {pipeline_mode = #tpu.pipeline_mode<synchronous>, transform_indices = @transform_10, window_bounds = array<i64: 1, 128>}, {pipeline_mode = #tpu.pipeline_mode<synchronous>, transform_indices = @transform_11, window_bounds = array<i64: 128, 128>}, {pipeline_mode = #tpu.pipeline_mode<synchronous>, transform_indices = @transform_12, window_bounds = array<i64: 1, 128>}, {transform_indices = @transform_13, window_bounds = array<i64: 16, 1>}]} {
    %c0 = arith.constant 0 : index
    %c0_0 = arith.constant 0 : index
    %0 = vector.load %arg1[%c0, %c0_0] : memref<16x128xf32, #tpu.memory_space<vmem>>, vector<16x128xf32>
    %1 = arith.truncf %0 : vector<16x128xf32> to vector<16x128xbf16>
    %c0_1 = arith.constant 0 : index
    %c0_2 = arith.constant 0 : index
    %2 = vector.load %arg2[%c0_1, %c0_2] : memref<128x128xbf16, #tpu.memory_space<vmem>>, vector<128x128xbf16>
    %cst = arith.constant dense<0.000000e+00> : vector<16x128xf32>
    %3 = tpu.matmul %1, %2, %cst {dimension_numbers = #tpu.dot_dimension_numbers<[1], [0], [0], [1], [0, 0, 1, 1], [], []>} : vector<16x128xbf16>, vector<128x128xbf16>, vector<16x128xf32> -> vector<16x128xf32>
    %c0_3 = arith.constant 0 : index
    %c0_4 = arith.constant 0 : index
    %4 = vector.load %arg3[%c0_3, %c0_4] : memref<1x128xf32, #tpu.memory_space<vmem>>, vector<1x128xf32>
    %5 = vector.broadcast %4 : vector<1x128xf32> to vector<16x128xf32>
    %6 = arith.addf %3, %5 : vector<16x128xf32>
    %7 = arith.truncf %6 : vector<16x128xf32> to vector<16x128xbf16>
    %cst_5 = arith.constant 5.000000e-01 : bf16
    %8 = vector.broadcast %cst_5 : bf16 to vector<16x128xbf16>
    %9 = arith.mulf %7, %8 : vector<16x128xbf16>
    %10 = math.tanh %9 : vector<16x128xbf16>
    %cst_6 = arith.constant 5.000000e-01 : bf16
    %11 = vector.broadcast %cst_6 : bf16 to vector<16x128xbf16>
    %12 = arith.mulf %10, %11 : vector<16x128xbf16>
    %cst_7 = arith.constant 5.000000e-01 : bf16
    %13 = vector.broadcast %cst_7 : bf16 to vector<16x128xbf16>
    %14 = arith.addf %12, %13 : vector<16x128xbf16>
    %c0_8 = arith.constant 0 : index
    %c0_9 = arith.constant 0 : index
    %15 = vector.load %arg4[%c0_8, %c0_9] : memref<128x128xbf16, #tpu.memory_space<vmem>>, vector<128x128xbf16>
    %cst_10 = arith.constant dense<0.000000e+00> : vector<16x128xf32>
    %16 = tpu.matmul %14, %15, %cst_10 {dimension_numbers = #tpu.dot_dimension_numbers<[1], [0], [0], [1], [0, 0, 1, 1], [], []>} : vector<16x128xbf16>, vector<128x128xbf16>, vector<16x128xf32> -> vector<16x128xf32>
    %c0_11 = arith.constant 0 : index
    %c0_12 = arith.constant 0 : index
    %17 = vector.load %arg5[%c0_11, %c0_12] : memref<1x128xf32, #tpu.memory_space<vmem>>, vector<1x128xf32>
    %18 = vector.broadcast %17 : vector<1x128xf32> to vector<16x128xf32>
    %19 = arith.addf %16, %18 : vector<16x128xf32>
    %20 = arith.truncf %19 : vector<16x128xf32> to vector<16x128xbf16>
    %cst_13 = arith.constant 5.000000e-01 : bf16
    %21 = vector.broadcast %cst_13 : bf16 to vector<16x128xbf16>
    %22 = arith.mulf %20, %21 : vector<16x128xbf16>
    %23 = math.tanh %22 : vector<16x128xbf16>
    %cst_14 = arith.constant 5.000000e-01 : bf16
    %24 = vector.broadcast %cst_14 : bf16 to vector<16x128xbf16>
    %25 = arith.mulf %23, %24 : vector<16x128xbf16>
    %cst_15 = arith.constant 5.000000e-01 : bf16
    %26 = vector.broadcast %cst_15 : bf16 to vector<16x128xbf16>
    %27 = arith.addf %25, %26 : vector<16x128xbf16>
    %c0_16 = arith.constant 0 : index
    %c0_17 = arith.constant 0 : index
    %28 = vector.load %arg6[%c0_16, %c0_17] : memref<128x128xbf16, #tpu.memory_space<vmem>>, vector<128x128xbf16>
    %cst_18 = arith.constant dense<0.000000e+00> : vector<16x128xf32>
    %29 = tpu.matmul %27, %28, %cst_18 {dimension_numbers = #tpu.dot_dimension_numbers<[1], [0], [0], [1], [0, 0, 1, 1], [], []>} : vector<16x128xbf16>, vector<128x128xbf16>, vector<16x128xf32> -> vector<16x128xf32>
    %c0_19 = arith.constant 0 : index
    %c0_20 = arith.constant 0 : index
    %30 = vector.load %arg7[%c0_19, %c0_20] : memref<1x128xf32, #tpu.memory_space<vmem>>, vector<1x128xf32>
    %31 = vector.broadcast %30 : vector<1x128xf32> to vector<16x128xf32>
    %32 = arith.addf %29, %31 : vector<16x128xf32>
    %33 = arith.truncf %32 : vector<16x128xf32> to vector<16x128xbf16>
    %cst_21 = arith.constant 5.000000e-01 : bf16
    %34 = vector.broadcast %cst_21 : bf16 to vector<16x128xbf16>
    %35 = arith.mulf %33, %34 : vector<16x128xbf16>
    %36 = math.tanh %35 : vector<16x128xbf16>
    %cst_22 = arith.constant 5.000000e-01 : bf16
    %37 = vector.broadcast %cst_22 : bf16 to vector<16x128xbf16>
    %38 = arith.mulf %36, %37 : vector<16x128xbf16>
    %cst_23 = arith.constant 5.000000e-01 : bf16
    %39 = vector.broadcast %cst_23 : bf16 to vector<16x128xbf16>
    %40 = arith.addf %38, %39 : vector<16x128xbf16>
    %c0_24 = arith.constant 0 : index
    %c0_25 = arith.constant 0 : index
    %41 = vector.load %arg8[%c0_24, %c0_25] : memref<128x128xbf16, #tpu.memory_space<vmem>>, vector<128x128xbf16>
    %cst_26 = arith.constant dense<0.000000e+00> : vector<16x128xf32>
    %42 = tpu.matmul %40, %41, %cst_26 {dimension_numbers = #tpu.dot_dimension_numbers<[1], [0], [0], [1], [0, 0, 1, 1], [], []>} : vector<16x128xbf16>, vector<128x128xbf16>, vector<16x128xf32> -> vector<16x128xf32>
    %c0_27 = arith.constant 0 : index
    %c0_28 = arith.constant 0 : index
    %43 = vector.load %arg9[%c0_27, %c0_28] : memref<1x128xf32, #tpu.memory_space<vmem>>, vector<1x128xf32>
    %44 = vector.broadcast %43 : vector<1x128xf32> to vector<16x128xf32>
    %45 = arith.addf %42, %44 : vector<16x128xf32>
    %46 = arith.truncf %45 : vector<16x128xf32> to vector<16x128xbf16>
    %cst_29 = arith.constant 5.000000e-01 : bf16
    %47 = vector.broadcast %cst_29 : bf16 to vector<16x128xbf16>
    %48 = arith.mulf %46, %47 : vector<16x128xbf16>
    %49 = math.tanh %48 : vector<16x128xbf16>
    %cst_30 = arith.constant 5.000000e-01 : bf16
    %50 = vector.broadcast %cst_30 : bf16 to vector<16x128xbf16>
    %51 = arith.mulf %49, %50 : vector<16x128xbf16>
    %cst_31 = arith.constant 5.000000e-01 : bf16
    %52 = vector.broadcast %cst_31 : bf16 to vector<16x128xbf16>
    %53 = arith.addf %51, %52 : vector<16x128xbf16>
    %c0_32 = arith.constant 0 : index
    %c0_33 = arith.constant 0 : index
    %54 = vector.load %arg10[%c0_32, %c0_33] : memref<128x128xbf16, #tpu.memory_space<vmem>>, vector<128x128xbf16>
    %cst_34 = arith.constant dense<0.000000e+00> : vector<16x128xf32>
    %55 = tpu.matmul %53, %54, %cst_34 {dimension_numbers = #tpu.dot_dimension_numbers<[1], [0], [0], [1], [0, 0, 1, 1], [], []>} : vector<16x128xbf16>, vector<128x128xbf16>, vector<16x128xf32> -> vector<16x128xf32>
    %c0_35 = arith.constant 0 : index
    %c0_36 = arith.constant 0 : index
    %56 = vector.load %arg11[%c0_35, %c0_36] : memref<1x128xf32, #tpu.memory_space<vmem>>, vector<1x128xf32>
    %57 = vector.broadcast %56 : vector<1x128xf32> to vector<16x128xf32>
    %58 = arith.addf %55, %57 : vector<16x128xf32>
    %59 = arith.truncf %58 : vector<16x128xf32> to vector<16x128xbf16>
    %cst_37 = arith.constant 5.000000e-01 : bf16
    %60 = vector.broadcast %cst_37 : bf16 to vector<16x128xbf16>
    %61 = arith.mulf %59, %60 : vector<16x128xbf16>
    %62 = math.tanh %61 : vector<16x128xbf16>
    %cst_38 = arith.constant 5.000000e-01 : bf16
    %63 = vector.broadcast %cst_38 : bf16 to vector<16x128xbf16>
    %64 = arith.mulf %62, %63 : vector<16x128xbf16>
    %cst_39 = arith.constant 5.000000e-01 : bf16
    %65 = vector.broadcast %cst_39 : bf16 to vector<16x128xbf16>
    %66 = arith.addf %64, %65 : vector<16x128xbf16>
    %cst_40 = arith.constant 0.000000e+00 : f32
    %67 = vector.broadcast %cst_40 : f32 to vector<16x1xf32>
    %c0_41 = arith.constant 0 : index
    %c0_42 = arith.constant 0 : index
    %68 = vector.load %arg12[%c0_41, %c0_42] : memref<128x128xbf16, #tpu.memory_space<vmem>>, vector<128x128xbf16>
    %cst_43 = arith.constant dense<0.000000e+00> : vector<16x128xf32>
    %69 = tpu.matmul %66, %68, %cst_43 {dimension_numbers = #tpu.dot_dimension_numbers<[1], [0], [0], [1], [0, 0, 1, 1], [], []>} : vector<16x128xbf16>, vector<128x128xbf16>, vector<16x128xf32> -> vector<16x128xf32>
    %c0_44 = arith.constant 0 : index
    %c0_45 = arith.constant 0 : index
    %70 = vector.load %arg13[%c0_44, %c0_45] : memref<1x128xf32, #tpu.memory_space<vmem>>, vector<1x128xf32>
    %71 = vector.broadcast %70 : vector<1x128xf32> to vector<16x128xf32>
    %72 = arith.addf %69, %71 : vector<16x128xf32>
    %cst_46 = arith.constant 5.000000e-01 : f32
    %73 = vector.broadcast %cst_46 : f32 to vector<16x128xf32>
    %74 = arith.mulf %72, %73 : vector<16x128xf32>
    %75 = math.tanh %74 : vector<16x128xf32>
    %cst_47 = arith.constant 5.000000e-01 : f32
    %76 = vector.broadcast %cst_47 : f32 to vector<16x128xf32>
    %77 = arith.mulf %75, %76 : vector<16x128xf32>
    %cst_48 = arith.constant 5.000000e-01 : f32
    %78 = vector.broadcast %cst_48 : f32 to vector<16x128xf32>
    %79 = arith.addf %77, %78 : vector<16x128xf32>
    %c0_49 = arith.constant 0 : index
    %c0_50 = arith.constant 0 : index
    %80 = vector.load %arg1[%c0_49, %c0_50] : memref<16x128xf32, #tpu.memory_space<vmem>>, vector<16x128xf32>
    %81 = arith.subf %79, %80 : vector<16x128xf32>
    %82 = tpu.iota {dimensions = array<i32: 1>} : vector<16x128xi32>
    %c0_i32 = arith.constant 0 : i32
    %83 = vector.broadcast %c0_i32 : i32 to vector<16x128xi32>
    %84 = arith.addi %83, %82 : vector<16x128xi32>
    %c16_i32 = arith.constant 16 : i32
    %85 = vector.broadcast %c16_i32 : i32 to vector<16x128xi32>
    %86 = arith.cmpi slt, %84, %85 : vector<16x128xi32>
    %cst_51 = arith.constant 0.000000e+00 : f32
    %87 = vector.broadcast %cst_51 : f32 to vector<16x128xf32>
    %88 = arith.select %86, %81, %87 : vector<16x128xi1>, vector<16x128xf32>
    %89 = arith.mulf %88, %88 : vector<16x128xf32>
    %cst_52 = arith.constant dense<0.000000e+00> : vector<16xf32>
    %90 = vector.multi_reduction <add>, %89, %cst_52 [1] : vector<16x128xf32> to vector<16xf32>
    %91 = vector.shape_cast %90 : vector<16xf32> to vector<16x1xf32>
    %92 = arith.addf %67, %91 : vector<16x1xf32>
    %cst_53 = arith.constant 6.250000e-02 : f32
    %93 = vector.broadcast %cst_53 : f32 to vector<16x1xf32>
    %94 = arith.mulf %92, %93 : vector<16x1xf32>
    %c0_54 = arith.constant 0 : index
    %c0_55 = arith.constant 0 : index
    %95 = vector.load %arg14[%c0_54, %c0_55] : memref<16x1xf32, #tpu.memory_space<vmem>>, vector<16x1xf32>
    tpu.vector_store %arg14[%c0_54, %c0_55], %94 {strides = array<i32>} : memref<16x1xf32, #tpu.memory_space<vmem>>, vector<16x1xf32>,
    return
  }
  func.func @transform_0(%arg0: i32) -> (i32, i32) {
    %c0_i32 = arith.constant 0 : i32
    %c0_i32_0 = arith.constant 0 : i32
    return %arg0, %c0_i32 : i32, i32
  }
  func.func @transform_1(%arg0: i32) -> (i32, i32) {
    %c0_i32 = arith.constant 0 : i32
    %c0_i32_0 = arith.constant 0 : i32
    %c0_i32_1 = arith.constant 0 : i32
    return %c0_i32, %c0_i32_0 : i32, i32
  }
  func.func @transform_2(%arg0: i32) -> (i32, i32) {
    %c0_i32 = arith.constant 0 : i32
    %c0_i32_0 = arith.constant 0 : i32
    %c0_i32_1 = arith.constant 0 : i32
    return %c0_i32, %c0_i32_0 : i32, i32
  }
  func.func @transform_3(%arg0: i32) -> (i32, i32) {
    %c0_i32 = arith.constant 0 : i32
    %c0_i32_0 = arith.constant 0 : i32
    %c0_i32_1 = arith.constant 0 : i32
    return %c0_i32, %c0_i32_0 : i32, i32
  }
  func.func @transform_4(%arg0: i32) -> (i32, i32) {
    %c0_i32 = arith.constant 0 : i32
    %c0_i32_0 = arith.constant 0 : i32
    %c0_i32_1 = arith.constant 0 : i32
    return %c0_i32, %c0_i32_0 : i32, i32
  }
  func.func @transform_5(%arg0: i32) -> (i32, i32) {
    %c0_i32 = arith.constant 0 : i32
    %c0_i32_0 = arith.constant 0 : i32
    %c0_i32_1 = arith.constant 0 : i32
    return %c0_i32, %c0_i32_0 : i32, i32
  }
  func.func @transform_6(%arg0: i32) -> (i32, i32) {
    %c0_i32 = arith.constant 0 : i32
    %c0_i32_0 = arith.constant 0 : i32
    %c0_i32_1 = arith.constant 0 : i32
    return %c0_i32, %c0_i32_0 : i32, i32
  }
  func.func @transform_7(%arg0: i32) -> (i32, i32) {
    %c0_i32 = arith.constant 0 : i32
    %c0_i32_0 = arith.constant 0 : i32
    %c0_i32_1 = arith.constant 0 : i32
    return %c0_i32, %c0_i32_0 : i32, i32
  }
  func.func @transform_8(%arg0: i32) -> (i32, i32) {
    %c0_i32 = arith.constant 0 : i32
    %c0_i32_0 = arith.constant 0 : i32
    %c0_i32_1 = arith.constant 0 : i32
    return %c0_i32, %c0_i32_0 : i32, i32
  }
  func.func @transform_9(%arg0: i32) -> (i32, i32) {
    %c0_i32 = arith.constant 0 : i32
    %c0_i32_0 = arith.constant 0 : i32
    %c0_i32_1 = arith.constant 0 : i32
    return %c0_i32, %c0_i32_0 : i32, i32
  }
  func.func @transform_10(%arg0: i32) -> (i32, i32) {
    %c0_i32 = arith.constant 0 : i32
    %c0_i32_0 = arith.constant 0 : i32
    %c0_i32_1 = arith.constant 0 : i32
    return %c0_i32, %c0_i32_0 : i32, i32
  }
  func.func @transform_11(%arg0: i32) -> (i32, i32) {
    %c0_i32 = arith.constant 0 : i32
    %c0_i32_0 = arith.constant 0 : i32
    %c0_i32_1 = arith.constant 0 : i32
    return %c0_i32, %c0_i32_0 : i32, i32
  }
  func.func @transform_12(%arg0: i32) -> (i32, i32) {
    %c0_i32 = arith.constant 0 : i32
    %c0_i32_0 = arith.constant 0 : i32
    %c0_i32_1 = arith.constant 0 : i32
    return %c0_i32, %c0_i32_0 : i32, i32
  }
  func.func @transform_13(%arg0: i32) -> (i32, i32) {
    %c0_i32 = arith.constant 0 : i32
    %c0_i32_0 = arith.constant 0 : i32
    return %arg0, %c0_i32 : i32, i32
  }
}

module attributes {stable_mosaic.version = 11 : i64} {
  func.func @kernel(%arg0: i32, %arg1: memref<16x128xf32, #tpu.memory_space<vmem>>, %arg2: memref<128x128xbf16, #tpu.memory_space<vmem>>, %arg3: memref<1x128xf32, #tpu.memory_space<vmem>>, %arg4: memref<128x128xbf16, #tpu.memory_space<vmem>>, %arg5: memref<1x128xf32, #tpu.memory_space<vmem>>, %arg6: memref<128x128xbf16, #tpu.memory_space<vmem>>, %arg7: memref<1x128xf32, #tpu.memory_space<vmem>>, %arg8: memref<128x128xbf16, #tpu.memory_space<vmem>>, %arg9: memref<1x128xf32, #tpu.memory_space<vmem>>, %arg10: memref<128x128xbf16, #tpu.memory_space<vmem>>, %arg11: memref<1x128xf32, #tpu.memory_space<vmem>>, %arg12: memref<128x128xbf16, #tpu.memory_space<vmem>>, %arg13: memref<1x128xf32, #tpu.memory_space<vmem>>, %arg14: memref<16x1xf32, #tpu.memory_space<vmem>>) attributes {dimension_semantics = [#tpu.dimension_semantics<parallel>], iteration_bounds = array<i64: 2>, scalar_prefetch = 0 : i64, scratch_operands = 0 : i64, tpu.core_type = #tpu.core_type<tc>, window_params = [{transform_indices = @transform_0, window_bounds = array<i64: 16, 128>}, {pipeline_mode = #tpu.pipeline_mode<synchronous>, transform_indices = @transform_1, window_bounds = array<i64: 128, 128>}, {pipeline_mode = #tpu.pipeline_mode<synchronous>, transform_indices = @transform_2, window_bounds = array<i64: 1, 128>}, {pipeline_mode = #tpu.pipeline_mode<synchronous>, transform_indices = @transform_3, window_bounds = array<i64: 128, 128>}, {pipeline_mode = #tpu.pipeline_mode<synchronous>, transform_indices = @transform_4, window_bounds = array<i64: 1, 128>}, {pipeline_mode = #tpu.pipeline_mode<synchronous>, transform_indices = @transform_5, window_bounds = array<i64: 128, 128>}, {pipeline_mode = #tpu.pipeline_mode<synchronous>, transform_indices = @transform_6, window_bounds = array<i64: 1, 128>}, {pipeline_mode = #tpu.pipeline_mode<synchronous>, transform_indices = @transform_7, window_bounds = array<i64: 128, 128>}, {pipeline_mode = #tpu.pipeline_mode<synchronous>, transform_indices = @transform_8, window_bounds = array<i64: 1, 128>}, {pipeline_mode = #tpu.pipeline_mode<synchronous>, transform_indices = @transform_9, window_bounds = array<i64: 128, 128>}, {pipeline_mode = #tpu.pipeline_mode<synchronous>, transform_indices = @transform_10, window_bounds = array<i64: 1, 128>}, {pipeline_mode = #tpu.pipeline_mode<synchronous>, transform_indices = @transform_11, window_bounds = array<i64: 128, 128>}, {pipeline_mode = #tpu.pipeline_mode<synchronous>, transform_indices = @transform_12, window_bounds = array<i64: 1, 128>}, {transform_indices = @transform_13, window_bounds = array<i64: 16, 1>}]} {
    %c0 = arith.constant 0 : index
    %c0_0 = arith.constant 0 : index
    %0 = vector.load %arg1[%c0, %c0_0] : memref<16x128xf32, #tpu.memory_space<vmem>>, vector<16x128xf32>
    %1 = arith.truncf %0 : vector<16x128xf32> to vector<16x128xbf16>
    %c0_1 = arith.constant 0 : index
    %c0_2 = arith.constant 0 : index
    %2 = vector.load %arg2[%c0_1, %c0_2] : memref<128x128xbf16, #tpu.memory_space<vmem>>, vector<128x128xbf16>
    %cst = arith.constant dense<0.000000e+00> : vector<16x128xf32>
    %3 = tpu.matmul %1, %2, %cst {dimension_numbers = #tpu.dot_dimension_numbers<[1], [0], [0], [1], [0, 0, 1, 1], [], []>} : vector<16x128xbf16>, vector<128x128xbf16>, vector<16x128xf32> -> vector<16x128xf32>
    %c0_3 = arith.constant 0 : index
    %c0_4 = arith.constant 0 : index
    %4 = vector.load %arg3[%c0_3, %c0_4] : memref<1x128xf32, #tpu.memory_space<vmem>>, vector<1x128xf32>
    %5 = vector.broadcast %4 : vector<1x128xf32> to vector<16x128xf32>
    %6 = arith.addf %3, %5 : vector<16x128xf32>
    %7 = arith.truncf %6 : vector<16x128xf32> to vector<16x128xbf16>
    %cst_5 = arith.constant 5.000000e-01 : bf16
    %8 = vector.broadcast %cst_5 : bf16 to vector<16x128xbf16>
    %9 = arith.mulf %7, %8 : vector<16x128xbf16>
    %10 = math.tanh %9 : vector<16x128xbf16>
    %cst_6 = arith.constant 5.000000e-01 : bf16
    %11 = vector.broadcast %cst_6 : bf16 to vector<16x128xbf16>
    %12 = arith.mulf %10, %11 : vector<16x128xbf16>
    %cst_7 = arith.constant 5.000000e-01 : bf16
    %13 = vector.broadcast %cst_7 : bf16 to vector<16x128xbf16>
    %14 = arith.addf %12, %13 : vector<16x128xbf16>
    %c0_8 = arith.constant 0 : index
    %c0_9 = arith.constant 0 : index
    %15 = vector.load %arg4[%c0_8, %c0_9] : memref<128x128xbf16, #tpu.memory_space<vmem>>, vector<128x128xbf16>
    %cst_10 = arith.constant dense<0.000000e+00> : vector<16x128xf32>
    %16 = tpu.matmul %14, %15, %cst_10 {dimension_numbers = #tpu.dot_dimension_numbers<[1], [0], [0], [1], [0, 0, 1, 1], [], []>} : vector<16x128xbf16>, vector<128x128xbf16>, vector<16x128xf32> -> vector<16x128xf32>
    %c0_11 = arith.constant 0 : index
    %c0_12 = arith.constant 0 : index
    %17 = vector.load %arg5[%c0_11, %c0_12] : memref<1x128xf32, #tpu.memory_space<vmem>>, vector<1x128xf32>
    %18 = vector.broadcast %17 : vector<1x128xf32> to vector<16x128xf32>
    %19 = arith.addf %16, %18 : vector<16x128xf32>
    %20 = arith.truncf %19 : vector<16x128xf32> to vector<16x128xbf16>
    %cst_13 = arith.constant 5.000000e-01 : bf16
    %21 = vector.broadcast %cst_13 : bf16 to vector<16x128xbf16>
    %22 = arith.mulf %20, %21 : vector<16x128xbf16>
    %23 = math.tanh %22 : vector<16x128xbf16>
    %cst_14 = arith.constant 5.000000e-01 : bf16
    %24 = vector.broadcast %cst_14 : bf16 to vector<16x128xbf16>
    %25 = arith.mulf %23, %24 : vector<16x128xbf16>
    %cst_15 = arith.constant 5.000000e-01 : bf16
    %26 = vector.broadcast %cst_15 : bf16 to vector<16x128xbf16>
    %27 = arith.addf %25, %26 : vector<16x128xbf16>
    %c0_16 = arith.constant 0 : index
    %c0_17 = arith.constant 0 : index
    %28 = vector.load %arg6[%c0_16, %c0_17] : memref<128x128xbf16, #tpu.memory_space<vmem>>, vector<128x128xbf16>
    %cst_18 = arith.constant dense<0.000000e+00> : vector<16x128xf32>
    %29 = tpu.matmul %27, %28, %cst_18 {dimension_numbers = #tpu.dot_dimension_numbers<[1], [0], [0], [1], [0, 0, 1, 1], [], []>} : vector<16x128xbf16>, vector<128x128xbf16>, vector<16x128xf32> -> vector<16x128xf32>
    %c0_19 = arith.constant 0 : index
    %c0_20 = arith.constant 0 : index
    %30 = vector.load %arg7[%c0_19, %c0_20] : memref<1x128xf32, #tpu.memory_space<vmem>>, vector<1x128xf32>
    %31 = vector.broadcast %30 : vector<1x128xf32> to vector<16x128xf32>
    %32 = arith.addf %29, %31 : vector<16x128xf32>
    %33 = arith.truncf %32 : vector<16x128xf32> to vector<16x128xbf16>
    %cst_21 = arith.constant 5.000000e-01 : bf16
    %34 = vector.broadcast %cst_21 : bf16 to vector<16x128xbf16>
    %35 = arith.mulf %33, %34 : vector<16x128xbf16>
    %36 = math.tanh %35 : vector<16x128xbf16>
    %cst_22 = arith.constant 5.000000e-01 : bf16
    %37 = vector.broadcast %cst_22 : bf16 to vector<16x128xbf16>
    %38 = arith.mulf %36, %37 : vector<16x128xbf16>
    %cst_23 = arith.constant 5.000000e-01 : bf16
    %39 = vector.broadcast %cst_23 : bf16 to vector<16x128xbf16>
    %40 = arith.addf %38, %39 : vector<16x128xbf16>
    %c0_24 = arith.constant 0 : index
    %c0_25 = arith.constant 0 : index
    %41 = vector.load %arg8[%c0_24, %c0_25] : memref<128x128xbf16, #tpu.memory_space<vmem>>, vector<128x128xbf16>
    %cst_26 = arith.constant dense<0.000000e+00> : vector<16x128xf32>
    %42 = tpu.matmul %40, %41, %cst_26 {dimension_numbers = #tpu.dot_dimension_numbers<[1], [0], [0], [1], [0, 0, 1, 1], [], []>} : vector<16x128xbf16>, vector<128x128xbf16>, vector<16x128xf32> -> vector<16x128xf32>
    %c0_27 = arith.constant 0 : index
    %c0_28 = arith.constant 0 : index
    %43 = vector.load %arg9[%c0_27, %c0_28] : memref<1x128xf32, #tpu.memory_space<vmem>>, vector<1x128xf32>
    %44 = vector.broadcast %43 : vector<1x128xf32> to vector<16x128xf32>
    %45 = arith.addf %42, %44 : vector<16x128xf32>
    %46 = arith.truncf %45 : vector<16x128xf32> to vector<16x128xbf16>
    %cst_29 = arith.constant 5.000000e-01 : bf16
    %47 = vector.broadcast %cst_29 : bf16 to vector<16x128xbf16>
    %48 = arith.mulf %46, %47 : vector<16x128xbf16>
    %49 = math.tanh %48 : vector<16x128xbf16>
    %cst_30 = arith.constant 5.000000e-01 : bf16
    %50 = vector.broadcast %cst_30 : bf16 to vector<16x128xbf16>
    %51 = arith.mulf %49, %50 : vector<16x128xbf16>
    %cst_31 = arith.constant 5.000000e-01 : bf16
    %52 = vector.broadcast %cst_31 : bf16 to vector<16x128xbf16>
    %53 = arith.addf %51, %52 : vector<16x128xbf16>
    %c0_32 = arith.constant 0 : index
    %c0_33 = arith.constant 0 : index
    %54 = vector.load %arg10[%c0_32, %c0_33] : memref<128x128xbf16, #tpu.memory_space<vmem>>, vector<128x128xbf16>
    %cst_34 = arith.constant dense<0.000000e+00> : vector<16x128xf32>
    %55 = tpu.matmul %53, %54, %cst_34 {dimension_numbers = #tpu.dot_dimension_numbers<[1], [0], [0], [1], [0, 0, 1, 1], [], []>} : vector<16x128xbf16>, vector<128x128xbf16>, vector<16x128xf32> -> vector<16x128xf32>
    %c0_35 = arith.constant 0 : index
    %c0_36 = arith.constant 0 : index
    %56 = vector.load %arg11[%c0_35, %c0_36] : memref<1x128xf32, #tpu.memory_space<vmem>>, vector<1x128xf32>
    %57 = vector.broadcast %56 : vector<1x128xf32> to vector<16x128xf32>
    %58 = arith.addf %55, %57 : vector<16x128xf32>
    %59 = arith.truncf %58 : vector<16x128xf32> to vector<16x128xbf16>
    %cst_37 = arith.constant 5.000000e-01 : bf16
    %60 = vector.broadcast %cst_37 : bf16 to vector<16x128xbf16>
    %61 = arith.mulf %59, %60 : vector<16x128xbf16>
    %62 = math.tanh %61 : vector<16x128xbf16>
    %cst_38 = arith.constant 5.000000e-01 : bf16
    %63 = vector.broadcast %cst_38 : bf16 to vector<16x128xbf16>
    %64 = arith.mulf %62, %63 : vector<16x128xbf16>
    %cst_39 = arith.constant 5.000000e-01 : bf16
    %65 = vector.broadcast %cst_39 : bf16 to vector<16x128xbf16>
    %66 = arith.addf %64, %65 : vector<16x128xbf16>
    %cst_40 = arith.constant 0.000000e+00 : f32
    %67 = vector.broadcast %cst_40 : f32 to vector<16x1xf32>
    %c0_41 = arith.constant 0 : index
    %c0_42 = arith.constant 0 : index
    %68 = vector.load %arg12[%c0_41, %c0_42] : memref<128x128xbf16, #tpu.memory_space<vmem>>, vector<128x128xbf16>
    %cst_43 = arith.constant dense<0.000000e+00> : vector<16x128xf32>
    %69 = tpu.matmul %66, %68, %cst_43 {dimension_numbers = #tpu.dot_dimension_numbers<[1], [0], [0], [1], [0, 0, 1, 1], [], []>} : vector<16x128xbf16>, vector<128x128xbf16>, vector<16x128xf32> -> vector<16x128xf32>
    %c0_44 = arith.constant 0 : index
    %c0_45 = arith.constant 0 : index
    %70 = vector.load %arg13[%c0_44, %c0_45] : memref<1x128xf32, #tpu.memory_space<vmem>>, vector<1x128xf32>
    %71 = vector.broadcast %70 : vector<1x128xf32> to vector<16x128xf32>
    %72 = arith.addf %69, %71 : vector<16x128xf32>
    %cst_46 = arith.constant 5.000000e-01 : f32
    %73 = vector.broadcast %cst_46 : f32 to vector<16x128xf32>
    %74 = arith.mulf %72, %73 : vector<16x128xf32>
    %75 = math.tanh %74 : vector<16x128xf32>
    %cst_47 = arith.constant 5.000000e-01 : f32
    %76 = vector.broadcast %cst_47 : f32 to vector<16x128xf32>
    %77 = arith.mulf %75, %76 : vector<16x128xf32>
    %cst_48 = arith.constant 5.000000e-01 : f32
    %78 = vector.broadcast %cst_48 : f32 to vector<16x128xf32>
    %79 = arith.addf %77, %78 : vector<16x128xf32>
    %c0_49 = arith.constant 0 : index
    %c0_50 = arith.constant 0 : index
    %80 = vector.load %arg1[%c0_49, %c0_50] : memref<16x128xf32, #tpu.memory_space<vmem>>, vector<16x128xf32>
    %81 = arith.subf %79, %80 : vector<16x128xf32>
    %82 = tpu.iota {dimensions = array<i32: 1>} : vector<16x128xi32>
    %c0_i32 = arith.constant 0 : i32
    %83 = vector.broadcast %c0_i32 : i32 to vector<16x128xi32>
    %84 = arith.addi %83, %82 : vector<16x128xi32>
    %c16_i32 = arith.constant 16 : i32
    %85 = vector.broadcast %c16_i32 : i32 to vector<16x128xi32>
    %86 = arith.cmpi slt, %84, %85 : vector<16x128xi32>
    %cst_51 = arith.constant 0.000000e+00 : f32
    %87 = vector.broadcast %cst_51 : f32 to vector<16x128xf32>
    %88 = arith.select %86, %81, %87 : vector<16x128xi1>, vector<16x128xf32>
    %89 = arith.mulf %88, %88 : vector<16x128xf32>
    %cst_52 = arith.constant dense<0.000000e+00> : vector<16xf32>
    %90 = vector.multi_reduction <add>, %89, %cst_52 [1] : vector<16x128xf32> to vector<16xf32>
    %91 = vector.shape_cast %90 : vector<16xf32> to vector<16x1xf32>
    %92 = arith.addf %67, %91 : vector<16x1xf32>
    %cst_53 = arith.constant 6.250000e-02 : f32
    %93 = vector.broadcast %cst_53 : f32 to vector<16x1xf32>
    %94 = arith.mulf %92, %93 : vector<16x1xf32>
    %c0_54 = arith.constant 0 : index
    %c0_55 = arith.constant 0 : index
    %95 = vector.load %arg14[%c0_54, %c0_55] : memref<16x1xf32, #tpu.memory_space<vmem>>, vector<16x1xf32>
    tpu.vector_store %arg14[%c0_54, %c0_55], %94 {strides = array<i32>} : memref<16x1xf32, #tpu.memory_space<vmem>>, vector<16x1xf32>,
    return
  }
  func.func @transform_0(%arg0: i32) -> (i32, i32) {
    %c0_i32 = arith.constant 0 : i32
    %c0_i32_0 = arith.constant 0 : i32
    return %arg0, %c0_i32 : i32, i32
  }
  func.func @transform_1(%arg0: i32) -> (i32, i32) {
    %c0_i32 = arith.constant 0 : i32
    %c0_i32_0 = arith.constant 0 : i32
    %c0_i32_1 = arith.constant 0 : i32
    return %c0_i32, %c0_i32_0 : i32, i32
  }
  func.func @transform_2(%arg0: i32) -> (i32, i32) {
    %c0_i32 = arith.constant 0 : i32
    %c0_i32_0 = arith.constant 0 : i32
    %c0_i32_1 = arith.constant 0 : i32
    return %c0_i32, %c0_i32_0 : i32, i32
  }
  func.func @transform_3(%arg0: i32) -> (i32, i32) {
    %c0_i32 = arith.constant 0 : i32
    %c0_i32_0 = arith.constant 0 : i32
    %c0_i32_1 = arith.constant 0 : i32
    return %c0_i32, %c0_i32_0 : i32, i32
  }
  func.func @transform_4(%arg0: i32) -> (i32, i32) {
    %c0_i32 = arith.constant 0 : i32
    %c0_i32_0 = arith.constant 0 : i32
    %c0_i32_1 = arith.constant 0 : i32
    return %c0_i32, %c0_i32_0 : i32, i32
  }
  func.func @transform_5(%arg0: i32) -> (i32, i32) {
    %c0_i32 = arith.constant 0 : i32
    %c0_i32_0 = arith.constant 0 : i32
    %c0_i32_1 = arith.constant 0 : i32
    return %c0_i32, %c0_i32_0 : i32, i32
  }
  func.func @transform_6(%arg0: i32) -> (i32, i32) {
    %c0_i32 = arith.constant 0 : i32
    %c0_i32_0 = arith.constant 0 : i32
    %c0_i32_1 = arith.constant 0 : i32
    return %c0_i32, %c0_i32_0 : i32, i32
  }
  func.func @transform_7(%arg0: i32) -> (i32, i32) {
    %c0_i32 = arith.constant 0 : i32
    %c0_i32_0 = arith.constant 0 : i32
    %c0_i32_1 = arith.constant 0 : i32
    return %c0_i32, %c0_i32_0 : i32, i32
  }
  func.func @transform_8(%arg0: i32) -> (i32, i32) {
    %c0_i32 = arith.constant 0 : i32
    %c0_i32_0 = arith.constant 0 : i32
    %c0_i32_1 = arith.constant 0 : i32
    return %c0_i32, %c0_i32_0 : i32, i32
  }
  func.func @transform_9(%arg0: i32) -> (i32, i32) {
    %c0_i32 = arith.constant 0 : i32
    %c0_i32_0 = arith.constant 0 : i32
    %c0_i32_1 = arith.constant 0 : i32
    return %c0_i32, %c0_i32_0 : i32, i32
  }
  func.func @transform_10(%arg0: i32) -> (i32, i32) {
    %c0_i32 = arith.constant 0 : i32
    %c0_i32_0 = arith.constant 0 : i32
    %c0_i32_1 = arith.constant 0 : i32
    return %c0_i32, %c0_i32_0 : i32, i32
  }
  func.func @transform_11(%arg0: i32) -> (i32, i32) {
    %c0_i32 = arith.constant 0 : i32
    %c0_i32_0 = arith.constant 0 : i32
    %c0_i32_1 = arith.constant 0 : i32
    return %c0_i32, %c0_i32_0 : i32, i32
  }
  func.func @transform_12(%arg0: i32) -> (i32, i32) {
    %c0_i32 = arith.constant 0 : i32
    %c0_i32_0 = arith.constant 0 : i32
    %c0_i32_1 = arith.constant 0 : i32
    return %c0_i32, %c0_i32_0 : i32, i32
  }
  func.func @transform_13(%arg0: i32) -> (i32, i32) {
    %c0_i32 = arith.constant 0 : i32
    %c0_i32_0 = arith.constant 0 : i32
    return %arg0, %c0_i32 : i32, i32
  }
}

</mosaic_0001>

<llo_original>
// kernel: tpu_custom_call.1
$region0: #{tpu_custom_call.1}
  #allocation0 [shape = 'u32[]', space=smem, size = 0x4, offset = 0x4, fixed_abs, tag = 'smem constant byte address 0x4 - core index']
  #allocation1 [shape = 'u32[144,128]{1,0:T(1,128)}', space=vmem, size = 0x12000, scoped, tag = 'internal scratch']
  %s0 = inlined_call_operand.hbm [shape: f32[32,128], index: 0, kind: input, shape index: {}]
  %s1 = inlined_call_operand.hbm [shape: bf16[128,128], index: 1, kind: input, shape index: {}]
  %s2 = inlined_call_operand.vmem [shape: f32[1,128], index: 2, kind: input, shape index: {}]
  %s3 = inlined_call_operand.hbm [shape: bf16[128,128], index: 3, kind: input, shape index: {}]
  %s4 = inlined_call_operand.vmem [shape: f32[1,128], index: 4, kind: input, shape index: {}]
  %s5 = inlined_call_operand.hbm [shape: bf16[128,128], index: 5, kind: input, shape index: {}]
  %s6 = inlined_call_operand.vmem [shape: f32[1,128], index: 6, kind: input, shape index: {}]
  %s7 = inlined_call_operand.hbm [shape: bf16[128,128], index: 7, kind: input, shape index: {}]
  %s8 = inlined_call_operand.vmem [shape: f32[1,128], index: 8, kind: input, shape index: {}]
  %s9 = inlined_call_operand.hbm [shape: bf16[128,128], index: 9, kind: input, shape index: {}]
  %s10 = inlined_call_operand.vmem [shape: f32[1,128], index: 10, kind: input, shape index: {}]
  %s11 = inlined_call_operand.hbm [shape: bf16[128,128], index: 11, kind: input, shape index: {}]
  %s12 = inlined_call_operand.vmem [shape: f32[1,128], index: 12, kind: input, shape index: {}]
  %s13 = inlined_call_operand.vmem [shape: f32[32,1], index: 13, kind: output, shape index: {}]
  %s14 = sld [smem:[#allocation0]]
  $region113: #{tpu_custom_call.1} parent=0
    _
  %s16 = ssub.s32 1, %s14
  %s17 = scalar_select 0, %s16, %s14
  $region1: #{tpu_custom_call.1} parent=0
    #allocation2 [shape = 'u8[16384]{0}', space=vmem, size = 0x4000, scoped, tag = 'input window, operand 0']
    #allocation3 [shape = 's32[2]{0}', space=sflag, size = 0x8, scoped, tag = 'scoped memory for tpu_custom_call.1']
    #allocation4 [shape = 'u8[32768]{0}', space=vmem, size = 0x8000, scoped, tag = 'input window, operand 1, single buffered']
    #allocation5 [shape = 's32[1]{0}', space=sflag, size = 0x4, scoped, tag = 'scoped memory for tpu_custom_call.1']
    #allocation6 [shape = 'u8[32768]{0}', space=vmem, size = 0x8000, scoped, tag = 'input window, operand 3, single buffered']
    #allocation7 [shape = 'u8[32768]{0}', space=vmem, size = 0x8000, scoped, tag = 'input window, operand 5, single buffered']
    #allocation8 [shape = 's32[1]{0}', space=sflag, size = 0x4, scoped, tag = 'scoped memory for tpu_custom_call.1']
    #allocation9 [shape = 'u8[32768]{0}', space=vmem, size = 0x8000, scoped, tag = 'input window, operand 7, single buffered']
    #allocation10 [shape = 'u8[32768]{0}', space=vmem, size = 0x8000, scoped, tag = 'input window, operand 9, single buffered']
    #allocation11 [shape = 's32[1]{0}', space=sflag, size = 0x4, scoped, tag = 'scoped memory for tpu_custom_call.1']
    #allocation12 [shape = 'u8[32768]{0}', space=vmem, size = 0x8000, scoped, tag = 'input window, operand 11, single buffered']
    %18 = vsyncpa [#allocation3], 0
    %s19 = scalar_lea.sflag [#allocation3], 1
    %20 = vsyncpa %s19, 0
    %21 = vsyncpa [#allocation5], 0
    %22 = vsyncpa [#allocation8], 0
    %23 = vsyncpa [#allocation11], 0
    loop: start=0, step=1, limit=4
    $region2: #{tpu_custom_call.1} parent=1 // loop_pre_header
      _
    $region3: #{tpu_custom_call.1} parent=1 // loop_header
      %s25 = sphi 0, %s29
      %p26 = scmp.ge.s32.totalorder %s25, 4
      %s35 = sphi 0, %s37
      %s38 = sphi 0, %s35
      %s39 = sphi 0, %s38
      %s55 = sphi 0, %s39
      %s59 = sphi 0, %s59
      %s61 = sphi 0, %s59
      %s62 = sphi 0, %s61
      %s76 = sphi 0, %s62
      %s80 = sphi 0, %s80
      %s82 = sphi 0, %s80
      %s83 = sphi 0, %s82
      %s97 = sphi 0, %s83
      %s101 = sphi 0, %s101
      %s103 = sphi 0, %s101
      %s104 = sphi 0, %s103
      %s118 = sphi 0, %s104
      %s122 = sphi 0, %s122
      %s124 = sphi 0, %s122
      %s125 = sphi 0, %s124
      %s139 = sphi 0, %s125
      %s143 = sphi 0, %s143
      %s145 = sphi 0, %s143
      %s146 = sphi 0, %s145
      %s160 = sphi 0, %s146
      %s164 = sphi 0, %s164
      %s166 = sphi 0, %s164
      %s167 = sphi 0, %s166
      %s181 = sphi 0, %s167
      %s185 = sphi 0, %s185
      %s187 = sphi 0, %s185
      %s188 = sphi 0, %s187
      %s202 = sphi 0, %s188
      %s206 = sphi 0, %s206
      %s208 = sphi 0, %s206
      %s209 = sphi 0, %s208
      %s223 = sphi 0, %s209
      %s227 = sphi 0, %s227
      %s229 = sphi 0, %s227
      %s230 = sphi 0, %s229
      %s244 = sphi 0, %s230
      %s248 = sphi 0, %s248
      %s250 = sphi 0, %s248
      %s251 = sphi 0, %s250
      %s265 = sphi 0, %s251
      %s269 = sphi 0, %s269
      %s271 = sphi 0, %s269
      %s272 = sphi 0, %s271
      %s286 = sphi 0, %s272
      %s290 = sphi 0, %s290
      %s292 = sphi 0, %s290
      %s293 = sphi 0, %s292
      %s307 = sphi 0, %s293
      %s313 = sphi 0, %s315
      %s316 = sphi 0, %s313
      %s317 = sphi 0, %s316
      %s333 = sphi 0, %s317
    $region4: #{tpu_custom_call.1} parent=1 // loop_header_branch
      %28 = sbr.rel (%p26) target = $region8
    $region5: #{tpu_custom_call.1} parent=1 // loop_body
      %s30 = ssub.s32 %s25, 1
      %s31 = ssub.s32 %s25, 2
      %s32 = sadd.s32 %s25, 1
      %s33 = ssub.s32 %s25, %s32
      %p34 = scmp.eq.s32.totalorder %s33, 0
      %s36 = sadd.s32 %s35, 1
      %s37 = scalar_select %p34, %s35, %s36
      %p40 = pneg %p34
      %p41 = scmp.eq.s32.totalorder %s25, 1
      %p42 = por %p40, %p41
      %p43 = scmp.ne.s32.totalorder %s35, %s38
      %p44 = scmp.eq.s32.totalorder %s25, 0
      %p45 = por %p43, %p44
      %p46 = scmp.ne.s32.totalorder %s35, %s38
      %p47 = scmp.eq.s32.totalorder %s30, 1
      %p48 = por %p46, %p47
      %p49 = scmp.ne.s32.totalorder %s38, %s39
      %p50 = scmp.eq.s32.totalorder %s30, 0
      %p51 = por %p49, %p50
      %p52 = scmp.ne.s32.totalorder %s38, %s39
      %p53 = scmp.eq.s32.totalorder %s31, 1
      %p54 = por %p52, %p53
      %p56 = scmp.ne.s32.totalorder %s39, %s55
      %p57 = scmp.eq.s32.totalorder %s31, 0
      %p58 = por %p56, %p57
      %s60 = sadd.s32 %s59, 1
      %p63 = scmp.eq.s32.totalorder %s25, 1
      %p64 = scmp.ne.s32.totalorder %s59, %s61
      %p65 = scmp.eq.s32.totalorder %s25, 0
      %p66 = por %p64, %p65
      %p67 = scmp.ne.s32.totalorder %s59, %s61
      %p68 = scmp.eq.s32.totalorder %s30, 1
      %p69 = por %p67, %p68
      %p70 = scmp.ne.s32.totalorder %s61, %s62
      %p71 = scmp.eq.s32.totalorder %s30, 0
      %p72 = por %p70, %p71
      %p73 = scmp.ne.s32.totalorder %s61, %s62
      %p74 = scmp.eq.s32.totalorder %s31, 1
      %p75 = por %p73, %p74
      %p77 = scmp.ne.s32.totalorder %s62, %s76
      %p78 = scmp.eq.s32.totalorder %s31, 0
      %p79 = por %p77, %p78
      %s81 = sadd.s32 %s80, 1
      %p84 = scmp.eq.s32.totalorder %s25, 1
      %p85 = scmp.ne.s32.totalorder %s80, %s82
      %p86 = scmp.eq.s32.totalorder %s25, 0
      %p87 = por %p85, %p86
      %p88 = scmp.ne.s32.totalorder %s80, %s82
      %p89 = scmp.eq.s32.totalorder %s30, 1
      %p90 = por %p88, %p89
      %p91 = scmp.ne.s32.totalorder %s82, %s83
      %p92 = scmp.eq.s32.totalorder %s30, 0
      %p93 = por %p91, %p92
      %p94 = scmp.ne.s32.totalorder %s82, %s83
      %p95 = scmp.eq.s32.totalorder %s31, 1
      %p96 = por %p94, %p95
      %p98 = scmp.ne.s32.totalorder %s83, %s97
      %p99 = scmp.eq.s32.totalorder %s31, 0
      %p100 = por %p98, %p99
      %s102 = sadd.s32 %s101, 1
      %p105 = scmp.eq.s32.totalorder %s25, 1
      %p106 = scmp.ne.s32.totalorder %s101, %s103
      %p107 = scmp.eq.s32.totalorder %s25, 0
      %p108 = por %p106, %p107
      %p109 = scmp.ne.s32.totalorder %s101, %s103
      %p110 = scmp.eq.s32.totalorder %s30, 1
      %p111 = por %p109, %p110
      %p112 = scmp.ne.s32.totalorder %s103, %s104
      %p113 = scmp.eq.s32.totalorder %s30, 0
      %p114 = por %p112, %p113
      %p115 = scmp.ne.s32.totalorder %s103, %s104
      %p116 = scmp.eq.s32.totalorder %s31, 1
      %p117 = por %p115, %p116
      %p119 = scmp.ne.s32.totalorder %s104, %s118
      %p120 = scmp.eq.s32.totalorder %s31, 0
      %p121 = por %p119, %p120
      %s123 = sadd.s32 %s122, 1
      %p126 = scmp.eq.s32.totalorder %s25, 1
      %p127 = scmp.ne.s32.totalorder %s122, %s124
      %p128 = scmp.eq.s32.totalorder %s25, 0
      %p129 = por %p127, %p128
      %p130 = scmp.ne.s32.totalorder %s122, %s124
      %p131 = scmp.eq.s32.totalorder %s30, 1
      %p132 = por %p130, %p131
      %p133 = scmp.ne.s32.totalorder %s124, %s125
      %p134 = scmp.eq.s32.totalorder %s30, 0
      %p135 = por %p133, %p134
      %p136 = scmp.ne.s32.totalorder %s124, %s125
      %p137 = scmp.eq.s32.totalorder %s31, 1
      %p138 = por %p136, %p137
      %p140 = scmp.ne.s32.totalorder %s125, %s139
      %p141 = scmp.eq.s32.totalorder %s31, 0
      %p142 = por %p140, %p141
      %s144 = sadd.s32 %s143, 1
      %p147 = scmp.eq.s32.totalorder %s25, 1
      %p148 = scmp.ne.s32.totalorder %s143, %s145
      %p149 = scmp.eq.s32.totalorder %s25, 0
      %p150 = por %p148, %p149
      %p151 = scmp.ne.s32.totalorder %s143, %s145
      %p152 = scmp.eq.s32.totalorder %s30, 1
      %p153 = por %p151, %p152
      %p154 = scmp.ne.s32.totalorder %s145, %s146
      %p155 = scmp.eq.s32.totalorder %s30, 0
      %p156 = por %p154, %p155
      %p157 = scmp.ne.s32.totalorder %s145, %s146
      %p158 = scmp.eq.s32.totalorder %s31, 1
      %p159 = por %p157, %p158
      %p161 = scmp.ne.s32.totalorder %s146, %s160
      %p162 = scmp.eq.s32.totalorder %s31, 0
      %p163 = por %p161, %p162
      %s165 = sadd.s32 %s164, 1
      %p168 = scmp.eq.s32.totalorder %s25, 1
      %p169 = scmp.ne.s32.totalorder %s164, %s166
      %p170 = scmp.eq.s32.totalorder %s25, 0
      %p171 = por %p169, %p170
      %p172 = scmp.ne.s32.totalorder %s164, %s166
      %p173 = scmp.eq.s32.totalorder %s30, 1
      %p174 = por %p172, %p173
      %p175 = scmp.ne.s32.totalorder %s166, %s167
      %p176 = scmp.eq.s32.totalorder %s30, 0
      %p177 = por %p175, %p176
      %p178 = scmp.ne.s32.totalorder %s166, %s167
      %p179 = scmp.eq.s32.totalorder %s31, 1
      %p180 = por %p178, %p179
      %p182 = scmp.ne.s32.totalorder %s167, %s181
      %p183 = scmp.eq.s32.totalorder %s31, 0
      %p184 = por %p182, %p183
      %s186 = sadd.s32 %s185, 1
      %p189 = scmp.eq.s32.totalorder %s25, 1
      %p190 = scmp.ne.s32.totalorder %s185, %s187
      %p191 = scmp.eq.s32.totalorder %s25, 0
      %p192 = por %p190, %p191
      %p193 = scmp.ne.s32.totalorder %s185, %s187
      %p194 = scmp.eq.s32.totalorder %s30, 1
      %p195 = por %p193, %p194
      %p196 = scmp.ne.s32.totalorder %s187, %s188
      %p197 = scmp.eq.s32.totalorder %s30, 0
      %p198 = por %p196, %p197
      %p199 = scmp.ne.s32.totalorder %s187, %s188
      %p200 = scmp.eq.s32.totalorder %s31, 1
      %p201 = por %p199, %p200
      %p203 = scmp.ne.s32.totalorder %s188, %s202
      %p204 = scmp.eq.s32.totalorder %s31, 0
      %p205 = por %p203, %p204
      %s207 = sadd.s32 %s206, 1
      %p210 = scmp.eq.s32.totalorder %s25, 1
      %p211 = scmp.ne.s32.totalorder %s206, %s208
      %p212 = scmp.eq.s32.totalorder %s25, 0
      %p213 = por %p211, %p212
      %p214 = scmp.ne.s32.totalorder %s206, %s208
      %p215 = scmp.eq.s32.totalorder %s30, 1
      %p216 = por %p214, %p215
      %p217 = scmp.ne.s32.totalorder %s208, %s209
      %p218 = scmp.eq.s32.totalorder %s30, 0
      %p219 = por %p217, %p218
      %p220 = scmp.ne.s32.totalorder %s208, %s209
      %p221 = scmp.eq.s32.totalorder %s31, 1
      %p222 = por %p220, %p221
      %p224 = scmp.ne.s32.totalorder %s209, %s223
      %p225 = scmp.eq.s32.totalorder %s31, 0
      %p226 = por %p224, %p225
      %s228 = sadd.s32 %s227, 1
      %p231 = scmp.eq.s32.totalorder %s25, 1
      %p232 = scmp.ne.s32.totalorder %s227, %s229
      %p233 = scmp.eq.s32.totalorder %s25, 0
      %p234 = por %p232, %p233
      %p235 = scmp.ne.s32.totalorder %s227, %s229
      %p236 = scmp.eq.s32.totalorder %s30, 1
      %p237 = por %p235, %p236
      %p238 = scmp.ne.s32.totalorder %s229, %s230
      %p239 = scmp.eq.s32.totalorder %s30, 0
      %p240 = por %p238, %p239
      %p241 = scmp.ne.s32.totalorder %s229, %s230
      %p242 = scmp.eq.s32.totalorder %s31, 1
      %p243 = por %p241, %p242
      %p245 = scmp.ne.s32.totalorder %s230, %s244
      %p246 = scmp.eq.s32.totalorder %s31, 0
      %p247 = por %p245, %p246
      %s249 = sadd.s32 %s248, 1
      %p252 = scmp.eq.s32.totalorder %s25, 1
      %p253 = scmp.ne.s32.totalorder %s248, %s250
      %p254 = scmp.eq.s32.totalorder %s25, 0
      %p255 = por %p253, %p254
      %p256 = scmp.ne.s32.totalorder %s248, %s250
      %p257 = scmp.eq.s32.totalorder %s30, 1
      %p258 = por %p256, %p257
      %p259 = scmp.ne.s32.totalorder %s250, %s251
      %p260 = scmp.eq.s32.totalorder %s30, 0
      %p261 = por %p259, %p260
      %p262 = scmp.ne.s32.totalorder %s250, %s251
      %p263 = scmp.eq.s32.totalorder %s31, 1
      %p264 = por %p262, %p263
      %p266 = scmp.ne.s32.totalorder %s251, %s265
      %p267 = scmp.eq.s32.totalorder %s31, 0
      %p268 = por %p266, %p267
      %s270 = sadd.s32 %s269, 1
      %p273 = scmp.eq.s32.totalorder %s25, 1
      %p274 = scmp.ne.s32.totalorder %s269, %s271
      %p275 = scmp.eq.s32.totalorder %s25, 0
      %p276 = por %p274, %p275
      %p277 = scmp.ne.s32.totalorder %s269, %s271
      %p278 = scmp.eq.s32.totalorder %s30, 1
      %p279 = por %p277, %p278
      %p280 = scmp.ne.s32.totalorder %s271, %s272
      %p281 = scmp.eq.s32.totalorder %s30, 0
      %p282 = por %p280, %p281
      %p283 = scmp.ne.s32.totalorder %s271, %s272
      %p284 = scmp.eq.s32.totalorder %s31, 1
      %p285 = por %p283, %p284
      %p287 = scmp.ne.s32.totalorder %s272, %s286
      %p288 = scmp.eq.s32.totalorder %s31, 0
      %p289 = por %p287, %p288
      %s291 = sadd.s32 %s290, 1
      %p294 = scmp.eq.s32.totalorder %s25, 1
      %p295 = scmp.ne.s32.totalorder %s290, %s292
      %p296 = scmp.eq.s32.totalorder %s25, 0
      %p297 = por %p295, %p296
      %p298 = scmp.ne.s32.totalorder %s290, %s292
      %p299 = scmp.eq.s32.totalorder %s30, 1
      %p300 = por %p298, %p299
      %p301 = scmp.ne.s32.totalorder %s292, %s293
      %p302 = scmp.eq.s32.totalorder %s30, 0
      %p303 = por %p301, %p302
      %p304 = scmp.ne.s32.totalorder %s292, %s293
      %p305 = scmp.eq.s32.totalorder %s31, 1
      %p306 = por %p304, %p305
      %p308 = scmp.ne.s32.totalorder %s293, %s307
      %p309 = scmp.eq.s32.totalorder %s31, 0
      %p310 = por %p308, %p309
      %s311 = ssub.s32 %s25, %s32
      %p312 = scmp.eq.s32.totalorder %s311, 0
      %s314 = sadd.s32 %s313, 1
      %s315 = scalar_select %p312, %s313, %s314
      %p318 = pneg %p312
      %p319 = scmp.eq.s32.totalorder %s25, 1
      %p320 = por %p318, %p319
      %p321 = scmp.ne.s32.totalorder %s313, %s316
      %p322 = scmp.eq.s32.totalorder %s25, 0
      %p323 = por %p321, %p322
      %p324 = scmp.ne.s32.totalorder %s313, %s316
      %p325 = scmp.eq.s32.totalorder %s30, 1
      %p326 = por %p324, %p325
      %p327 = scmp.ne.s32.totalorder %s316, %s317
      %p328 = scmp.eq.s32.totalorder %s30, 0
      %p329 = por %p327, %p328
      %p330 = scmp.ne.s32.totalorder %s316, %s317
      %p331 = scmp.eq.s32.totalorder %s31, 1
      %p332 = por %p330, %p331
      %p334 = scmp.ne.s32.totalorder %s317, %s333
      %p335 = scmp.eq.s32.totalorder %s31, 0
      %p336 = por %p334, %p335
      %p337 = scmp.le.s32.totalorder 1, %s25
      %p338 = scmp.lt.s32.totalorder %s25, 3
      %p339 = pnand %p337, %p338
      %p340 = pneg %p339
      // Predicated region
      $region9: #{tpu_custom_call.1} parent=5 // pred_check
        _
      $region10: #{tpu_custom_call.1} parent=5 // pred_check_branch
        %342 = sbr.rel (%p339) target = $region12
      $region11: #{tpu_custom_call.1} parent=5 // pred_region
        %s343 = ssub.s32 %s25, 1
        // Predicated region
        $region13: #{tpu_custom_call.1} parent=11 // pred_check
          %p344 = pneg %p72
        $region14: #{tpu_custom_call.1} parent=11 // pred_check_branch
          %346 = sbr.rel (%p344) target = $region16
        $region15: #{tpu_custom_call.1} parent=11 // pred_region
          %s348 = ssub.s32 1024, 1024
          %349 = vsyncadd [#allocation5], %s348
          %s350 = sshll.u32 [#allocation4], 4
          %s351 = int_to_ptr.vmem [resolvable:$true] %s350
          %356 = dma.hbm_to_vmem [thread:$0]  %s1, 1024, %s351, [#allocation5], 64, 64, 4
        $region16: #{tpu_custom_call.1} parent=11 // pred_fallthru
          _
        // Predicated region
        $region17: #{tpu_custom_call.1} parent=11 // pred_check
          %p357 = pneg %p93
        $region18: #{tpu_custom_call.1} parent=11 // pred_check_branch
          %359 = sbr.rel (%p357) target = $region20
        $region19: #{tpu_custom_call.1} parent=11 // pred_region
          _
        $region20: #{tpu_custom_call.1} parent=11 // pred_fallthru
          _
        // Predicated region
        $region21: #{tpu_custom_call.1} parent=11 // pred_check
          %p360 = pneg %p114
        $region22: #{tpu_custom_call.1} parent=11 // pred_check_branch
          %362 = sbr.rel (%p360) target = $region24
        $region23: #{tpu_custom_call.1} parent=11 // pred_region
          %s364 = ssub.s32 1024, 1024
          %365 = vsyncadd [#allocation5], %s364
          %s366 = sshll.u32 [#allocation6], 4
          %s367 = int_to_ptr.vmem [resolvable:$true] %s366
          %372 = dma.hbm_to_vmem [thread:$0]  %s3, 1024, %s367, [#allocation5], 64, 64, 4
        $region24: #{tpu_custom_call.1} parent=11 // pred_fallthru
          _
        // Predicated region
        $region25: #{tpu_custom_call.1} parent=11 // pred_check
          %p373 = pneg %p135
        $region26: #{tpu_custom_call.1} parent=11 // pred_check_branch
          %375 = sbr.rel (%p373) target = $region28
        $region27: #{tpu_custom_call.1} parent=11 // pred_region
          _
        $region28: #{tpu_custom_call.1} parent=11 // pred_fallthru
          _
        // Predicated region
        $region29: #{tpu_custom_call.1} parent=11 // pred_check
          %p376 = pneg %p156
        $region30: #{tpu_custom_call.1} parent=11 // pred_check_branch
          %378 = sbr.rel (%p376) target = $region32
        $region31: #{tpu_custom_call.1} parent=11 // pred_region
          %s380 = ssub.s32 1024, 1024
          %381 = vsyncadd [#allocation8], %s380
          %s382 = sshll.u32 [#allocation7], 4
          %s383 = int_to_ptr.vmem [resolvable:$true] %s382
          %388 = dma.hbm_to_vmem [thread:$0]  %s5, 1024, %s383, [#allocation8], 64, 64, 4
        $region32: #{tpu_custom_call.1} parent=11 // pred_fallthru
          _
        // Predicated region
        $region33: #{tpu_custom_call.1} parent=11 // pred_check
          %p389 = pneg %p177
        $region34: #{tpu_custom_call.1} parent=11 // pred_check_branch
          %391 = sbr.rel (%p389) target = $region36
        $region35: #{tpu_custom_call.1} parent=11 // pred_region
          _
        $region36: #{tpu_custom_call.1} parent=11 // pred_fallthru
          _
        // Predicated region
        $region37: #{tpu_custom_call.1} parent=11 // pred_check
          %p392 = pneg %p198
        $region38: #{tpu_custom_call.1} parent=11 // pred_check_branch
          %394 = sbr.rel (%p392) target = $region40
        $region39: #{tpu_custom_call.1} parent=11 // pred_region
          %s396 = ssub.s32 1024, 1024
          %397 = vsyncadd [#allocation8], %s396
          %s398 = sshll.u32 [#allocation9], 4
          %s399 = int_to_ptr.vmem [resolvable:$true] %s398
          %404 = dma.hbm_to_vmem [thread:$0]  %s7, 1024, %s399, [#allocation8], 64, 64, 4
        $region40: #{tpu_custom_call.1} parent=11 // pred_fallthru
          _
        // Predicated region
        $region41: #{tpu_custom_call.1} parent=11 // pred_check
          %p405 = pneg %p219
        $region42: #{tpu_custom_call.1} parent=11 // pred_check_branch
          %407 = sbr.rel (%p405) target = $region44
        $region43: #{tpu_custom_call.1} parent=11 // pred_region
          _
        $region44: #{tpu_custom_call.1} parent=11 // pred_fallthru
          _
        // Predicated region
        $region45: #{tpu_custom_call.1} parent=11 // pred_check
          %p408 = pneg %p240
        $region46: #{tpu_custom_call.1} parent=11 // pred_check_branch
          %410 = sbr.rel (%p408) target = $region48
        $region47: #{tpu_custom_call.1} parent=11 // pred_region
          %s412 = ssub.s32 1024, 1024
          %413 = vsyncadd [#allocation11], %s412
          %s414 = sshll.u32 [#allocation10], 4
          %s415 = int_to_ptr.vmem [resolvable:$true] %s414
          %420 = dma.hbm_to_vmem [thread:$0]  %s9, 1024, %s415, [#allocation11], 64, 64, 4
        $region48: #{tpu_custom_call.1} parent=11 // pred_fallthru
          _
        // Predicated region
        $region49: #{tpu_custom_call.1} parent=11 // pred_check
          %p421 = pneg %p261
        $region50: #{tpu_custom_call.1} parent=11 // pred_check_branch
          %423 = sbr.rel (%p421) target = $region52
        $region51: #{tpu_custom_call.1} parent=11 // pred_region
          _
        $region52: #{tpu_custom_call.1} parent=11 // pred_fallthru
          _
        // Predicated region
        $region53: #{tpu_custom_call.1} parent=11 // pred_check
          %p424 = pneg %p282
        $region54: #{tpu_custom_call.1} parent=11 // pred_check_branch
          %426 = sbr.rel (%p424) target = $region56
        $region55: #{tpu_custom_call.1} parent=11 // pred_region
          %s428 = ssub.s32 1024, 1024
          %429 = vsyncadd [#allocation11], %s428
          %s430 = sshll.u32 [#allocation12], 4
          %s431 = int_to_ptr.vmem [resolvable:$true] %s430
          %436 = dma.hbm_to_vmem [thread:$0]  %s11, 1024, %s431, [#allocation11], 64, 64, 4
        $region56: #{tpu_custom_call.1} parent=11 // pred_fallthru
          _
        // Predicated region
        $region57: #{tpu_custom_call.1} parent=11 // pred_check
          %p437 = pneg %p303
        $region58: #{tpu_custom_call.1} parent=11 // pred_check_branch
          %439 = sbr.rel (%p437) target = $region60
        $region59: #{tpu_custom_call.1} parent=11 // pred_region
          _
        $region60: #{tpu_custom_call.1} parent=11 // pred_fallthru
          _
      $region12: #{tpu_custom_call.1} parent=5 // pred_fallthru
        _
      %p440 = scmp.lt.s32.totalorder %s25, 2
      // Predicated region
      $region61: #{tpu_custom_call.1} parent=5 // pred_check
        %p441 = pneg %p440
      $region62: #{tpu_custom_call.1} parent=5 // pred_check_branch
        %443 = sbr.rel (%p441) target = $region64
      $region63: #{tpu_custom_call.1} parent=5 // pred_region
        // Predicated region
        $region65: #{tpu_custom_call.1} parent=63 // pred_check
          %p444 = pneg %p45
        $region66: #{tpu_custom_call.1} parent=63 // pred_check_branch
          %446 = sbr.rel (%p444) target = $region68
        $region67: #{tpu_custom_call.1} parent=63 // pred_region
          %s447 = sand.u32 %s35, 1
          %s448 = scalar_lea.sflag [#allocation3], %s447
          %s449 = sand.u32 %s35, 1
          %s450 = smul.addr %s449, 16
          %s451 = scalar_lea.vmem [#allocation2], %s450
          %s452 = smul.u32 2, %s25
          %s454 = ssub.s32 256, 256
          %455 = vsyncadd %s448, %s454
          %s456 = smul.addr %s452, 128
          %s457 = scalar_lea.hbm %s0, %s456
          %s458 = sshll.u32 %s451, 4
          %s459 = int_to_ptr.vmem [resolvable:$true] %s458
          %464 = dma.hbm_to_vmem [thread:$0]  %s457, 256, %s459, %s448, 128, 128, 8
        $region68: #{tpu_custom_call.1} parent=63 // pred_fallthru
          _
      $region64: #{tpu_custom_call.1} parent=5 // pred_fallthru
        _
      %p465 = scmp.le.s32.totalorder 1, %s25
      %p466 = scmp.lt.s32.totalorder %s25, 3
      %p467 = pnand %p465, %p466
      %p468 = pneg %p467
      // Predicated region
      $region69: #{tpu_custom_call.1} parent=5 // pred_check
        _
      $region70: #{tpu_custom_call.1} parent=5 // pred_check_branch
        %470 = sbr.rel (%p467) target = $region72
      $region71: #{tpu_custom_call.1} parent=5 // pred_region
        %s471 = ssub.s32 %s25, 1
        %s472 = sand.u32 %s38, 1
        %s473 = scalar_lea.sflag [#allocation3], %s472
        %s474 = sand.u32 %s38, 1
        %s475 = smul.addr %s474, 16
        %s476 = scalar_lea.vmem [#allocation2], %s475
        // Predicated region
        $region73: #{tpu_custom_call.1} parent=71 // pred_check
          %p477 = pneg %p51
        $region74: #{tpu_custom_call.1} parent=71 // pred_check_branch
          %479 = sbr.rel (%p477) target = $region76
        $region75: #{tpu_custom_call.1} parent=71 // pred_region
          %480 = dma.done %s473, 256
        $region76: #{tpu_custom_call.1} parent=71 // pred_fallthru
          _
        // Predicated region
        $region77: #{tpu_custom_call.1} parent=71 // pred_check
          %p481 = pneg %p72
        $region78: #{tpu_custom_call.1} parent=71 // pred_check_branch
          %483 = sbr.rel (%p481) target = $region80
        $region79: #{tpu_custom_call.1} parent=71 // pred_region
          %484 = dma.done [#allocation5], 1024
        $region80: #{tpu_custom_call.1} parent=71 // pred_fallthru
          _
        // Predicated region
        $region81: #{tpu_custom_call.1} parent=71 // pred_check
          %p485 = pneg %p114
        $region82: #{tpu_custom_call.1} parent=71 // pred_check_branch
          %487 = sbr.rel (%p485) target = $region84
        $region83: #{tpu_custom_call.1} parent=71 // pred_region
          %488 = dma.done [#allocation5], 1024
        $region84: #{tpu_custom_call.1} parent=71 // pred_fallthru
          _
        // Predicated region
        $region85: #{tpu_custom_call.1} parent=71 // pred_check
          %p489 = pneg %p156
        $region86: #{tpu_custom_call.1} parent=71 // pred_check_branch
          %491 = sbr.rel (%p489) target = $region88
        $region87: #{tpu_custom_call.1} parent=71 // pred_region
          %492 = dma.done [#allocation8], 1024
        $region88: #{tpu_custom_call.1} parent=71 // pred_fallthru
          _
        // Predicated region
        $region89: #{tpu_custom_call.1} parent=71 // pred_check
          %p493 = pneg %p198
        $region90: #{tpu_custom_call.1} parent=71 // pred_check_branch
          %495 = sbr.rel (%p493) target = $region92
        $region91: #{tpu_custom_call.1} parent=71 // pred_region
          %496 = dma.done [#allocation8], 1024
        $region92: #{tpu_custom_call.1} parent=71 // pred_fallthru
          _
        // Predicated region
        $region93: #{tpu_custom_call.1} parent=71 // pred_check
          %p497 = pneg %p240
        $region94: #{tpu_custom_call.1} parent=71 // pred_check_branch
          %499 = sbr.rel (%p497) target = $region96
        $region95: #{tpu_custom_call.1} parent=71 // pred_region
          %500 = dma.done [#allocation11], 1024
        $region96: #{tpu_custom_call.1} parent=71 // pred_fallthru
          _
        // Predicated region
        $region97: #{tpu_custom_call.1} parent=71 // pred_check
          %p501 = pneg %p282
        $region98: #{tpu_custom_call.1} parent=71 // pred_check_branch
          %503 = sbr.rel (%p501) target = $region100
        $region99: #{tpu_custom_call.1} parent=71 // pred_region
          %504 = dma.done [#allocation11], 1024
        $region100: #{tpu_custom_call.1} parent=71 // pred_fallthru
          _
        %s505 = sand.u32 %s38, 1
        %s506 = scalar_lea.sflag [#allocation3], %s505
        %s507 = sand.u32 %s38, 1
        %s508 = smul.addr %s507, 16
        %s509 = scalar_lea.vmem [#allocation2], %s508
        %p510 = pneg %p51
        %p511 = pneg %p48
        %p512 = pneg %p72
        %p513 = pneg %p69
        %p514 = pneg %p93
        %p515 = pneg %p90
        %p516 = pneg %p114
        %p517 = pneg %p111
        %p518 = pneg %p135
        %p519 = pneg %p132
        %p520 = pneg %p156
        %p521 = pneg %p153
        %p522 = pneg %p177
        %p523 = pneg %p174
        %p524 = pneg %p198
        %p525 = pneg %p195
        %p526 = pneg %p219
        %p527 = pneg %p216
        %p528 = pneg %p240
        %p529 = pneg %p237
        %p530 = pneg %p261
        %p531 = pneg %p258
        %p532 = pneg %p282
        %p533 = pneg %p279
        %p534 = pneg %p303
        %p535 = pneg %p300
        %p536 = pneg %p329
        %p537 = pneg %p326
        %s538 = smul.u32 2, %s30
        %p539 = scmp.lt.s32.totalorder %s538, 3
        %s540 = scalar_select %p539, %s538, 3
        %s541 = smul.addr %s540, 8
        %s542 = scalar_lea.vmem %s13, %s541
        %s543 = smul.u32 2, %s30
        %s544 = smul.u32 2, %s30
        %p545 = scmp.lt.s32.totalorder %s544, 3
        %s546 = scalar_select %p545, %s544, 3
        %s547 = smul.addr %s546, 8
        %s548 = scalar_lea.vmem %s13, %s547
        %s549 = smul.u32 2, %s30
        %v552 = vld [vmem:[%s476] sm:$0xff]
        %v553 = vld [vmem:[%s476 + $0x8] sm:$0xff]
        %v554 = vpack.c.bf16 %v553, %v552
        %v555 = vld [vmem:[#allocation4] sm:$0xf]
        %v556 = vld [vmem:[#allocation4 + $0x4] sm:$0xf]
        %v557 = vld [vmem:[#allocation4 + $0x8] sm:$0xf]
        %v558 = vld [vmem:[#allocation4 + $0xc] sm:$0xf]
        %v559 = vld [vmem:[#allocation4 + $0x10] sm:$0xf]
        %v560 = vld [vmem:[#allocation4 + $0x14] sm:$0xf]
        %v561 = vld [vmem:[#allocation4 + $0x18] sm:$0xf]
        %v562 = vld [vmem:[#allocation4 + $0x1c] sm:$0xf]
        %v563 = vld [vmem:[#allocation4 + $0x20] sm:$0xf]
        %v564 = vld [vmem:[#allocation4 + $0x24] sm:$0xf]
        %v565 = vld [vmem:[#allocation4 + $0x28] sm:$0xf]
        %v566 = vld [vmem:[#allocation4 + $0x2c] sm:$0xf]
        %v567 = vld [vmem:[#allocation4 + $0x30] sm:$0xf]
        %v568 = vld [vmem:[#allocation4 + $0x34] sm:$0xf]
        %v569 = vld [vmem:[#allocation4 + $0x38] sm:$0xf]
        %v570 = vld [vmem:[#allocation4 + $0x3c] sm:$0xf]
        %v571 = vld [vmem:[%s2] sm:$0x1]
        %v573 = vlaneseq
        %v574 = vshrl.u32 %v573, 7
        %v575 = vsub.s32 0, %v574
        %v576 = vrot.slane %v571, %v575
        %v594 = vunpack.c.l.b16 %v555
        %v595 = vunpack.c.l.b16 %v556
        %v596 = vunpack.c.l.b16 %v557
        %v597 = vunpack.c.l.b16 %v558
        %v598 = vunpack.c.l.b16 %v559
        %v599 = vunpack.c.l.b16 %v560
        %v600 = vunpack.c.l.b16 %v561
        %v601 = vunpack.c.l.b16 %v562
        %v602 = vunpack.c.l.b16 %v563
        %v603 = vunpack.c.l.b16 %v564
        %v604 = vunpack.c.l.b16 %v565
        %v605 = vunpack.c.l.b16 %v566
        %v606 = vunpack.c.l.b16 %v567
        %v607 = vunpack.c.l.b16 %v568
        %v608 = vunpack.c.l.b16 %v569
        %v609 = vunpack.c.l.b16 %v570
        %v610 = vpack.c.b16 %v595, %v594
        %v611 = vpack.c.b16 %v597, %v596
        %v612 = vpack.c.b16 %v599, %v598
        %v613 = vpack.c.b16 %v601, %v600
        %v614 = vpack.c.b16 %v603, %v602
        %v615 = vpack.c.b16 %v605, %v604
        %v616 = vpack.c.b16 %v607, %v606
        %v617 = vpack.c.b16 %v609, %v608
        %626 = vmatprep.subr.bf16.mxu0 0
        %627 = vmatpush1.bf16.msra.mxu0 %v610
        %628 = vmatprep.subr.bf16.mxu0 0
        %629 = vmatpush1.bf16.msra.mxu0 %v611
        %630 = vmatprep.subr.bf16.mxu0 0
        %631 = vmatpush1.bf16.msra.mxu0 %v612
        %632 = vmatprep.subr.bf16.mxu0 0
        %633 = vmatpush1.bf16.msra.mxu0 %v613
        %634 = vmatprep.subr.bf16.mxu0 0
        %635 = vmatpush1.bf16.msra.mxu0 %v614
        %636 = vmatprep.subr.bf16.mxu0 0
        %637 = vmatpush1.bf16.msra.mxu0 %v615
        %638 = vmatprep.subr.bf16.mxu0 0
        %639 = vmatpush1.bf16.msra.mxu0 %v616
        %640 = vmatprep.subr.bf16.mxu0 0
        %641 = vmatpush1.bf16.msra.mxu0 %v617
        %642 = vmatprep.subr.bf16.mxu0 0
        %643 = vmatpush1.bf16.msra.mxu0 0
        %644 = vmatprep.subr.bf16.mxu0 0
        %645 = vmatpush1.bf16.msra.mxu0 0
        %646 = vmatprep.subr.bf16.mxu0 0
        %647 = vmatpush1.bf16.msra.mxu0 0
        %648 = vmatprep.subr.bf16.mxu0 0
        %649 = vmatpush1.bf16.msra.mxu0 0
        %650 = vmatprep.subr.bf16.mxu0 0
        %651 = vmatpush1.bf16.msra.mxu0 0
        %652 = vmatprep.subr.bf16.mxu0 0
        %653 = vmatpush1.bf16.msra.mxu0 0
        %654 = vmatprep.subr.bf16.mxu0 0
        %655 = vmatpush1.bf16.msra.mxu0 0
        %656 = vmatprep.subr.bf16.mxu0 0
        %657 = vmatpush1.bf16.msra.mxu0 0
        %658 = vmatprep.mubr.bf16.mxu0 0
        %659 = vmatmul.mubr.bf16.gmra.mrb[0].mxu0 %v554
        %v660 = vpop.f32.mrb[0].mxu0
        %v661 = vadd.f32 %v576, %v660
        %v662 = vpop.f32.mrb[0].mxu0
        %v663 = vpop.f32.mrb[0].mxu0
        %v664 = vadd.f32 %v576, %v663
        %v665 = vpop.f32.mrb[0].mxu0
        %666 = vdwg.mxu0
        %v667 = vpack.c.bf16 %v664, %v661
        %v668 = vmul.bf16 %v667, 1056980736
        %v669 = vtanh.bf16.pop %v668
        %v670 = vmul.bf16 %v669, 1056980736
        %v671 = vadd.bf16 %v670, 1056980736
        %v672 = vld [vmem:[#allocation6] sm:$0xf]
        %v673 = vld [vmem:[#allocation6 + $0x4] sm:$0xf]
        %v674 = vld [vmem:[#allocation6 + $0x8] sm:$0xf]
        %v675 = vld [vmem:[#allocation6 + $0xc] sm:$0xf]
        %v676 = vld [vmem:[#allocation6 + $0x10] sm:$0xf]
        %v677 = vld [vmem:[#allocation6 + $0x14] sm:$0xf]
        %v678 = vld [vmem:[#allocation6 + $0x18] sm:$0xf]
        %v679 = vld [vmem:[#allocation6 + $0x1c] sm:$0xf]
        %v680 = vld [vmem:[#allocation6 + $0x20] sm:$0xf]
        %v681 = vld [vmem:[#allocation6 + $0x24] sm:$0xf]
        %v682 = vld [vmem:[#allocation6 + $0x28] sm:$0xf]
        %v683 = vld [vmem:[#allocation6 + $0x2c] sm:$0xf]
        %v684 = vld [vmem:[#allocation6 + $0x30] sm:$0xf]
        %v685 = vld [vmem:[#allocation6 + $0x34] sm:$0xf]
        %v686 = vld [vmem:[#allocation6 + $0x38] sm:$0xf]
        %v687 = vld [vmem:[#allocation6 + $0x3c] sm:$0xf]
        %v688 = vld [vmem:[%s4] sm:$0x1]
        %v690 = vlaneseq
        %v691 = vshrl.u32 %v690, 7
        %v692 = vsub.s32 0, %v691
        %v693 = vrot.slane %v688, %v692
        %v711 = vunpack.c.l.b16 %v672
        %v712 = vunpack.c.l.b16 %v673
        %v713 = vunpack.c.l.b16 %v674
        %v714 = vunpack.c.l.b16 %v675
        %v715 = vunpack.c.l.b16 %v676
        %v716 = vunpack.c.l.b16 %v677
        %v717 = vunpack.c.l.b16 %v678
        %v718 = vunpack.c.l.b16 %v679
        %v719 = vunpack.c.l.b16 %v680
        %v720 = vunpack.c.l.b16 %v681
        %v721 = vunpack.c.l.b16 %v682
        %v722 = vunpack.c.l.b16 %v683
        %v723 = vunpack.c.l.b16 %v684
        %v724 = vunpack.c.l.b16 %v685
        %v725 = vunpack.c.l.b16 %v686
        %v726 = vunpack.c.l.b16 %v687
        %v727 = vpack.c.b16 %v712, %v711
        %v728 = vpack.c.b16 %v714, %v713
        %v729 = vpack.c.b16 %v716, %v715
        %v730 = vpack.c.b16 %v718, %v717
        %v731 = vpack.c.b16 %v720, %v719
        %v732 = vpack.c.b16 %v722, %v721
        %v733 = vpack.c.b16 %v724, %v723
        %v734 = vpack.c.b16 %v726, %v725
        %743 = vmatprep.subr.bf16.mxu0 0
        %744 = vmatpush1.bf16.msra.mxu0 %v727
        %745 = vmatprep.subr.bf16.mxu0 0
        %746 = vmatpush1.bf16.msra.mxu0 %v728
        %747 = vmatprep.subr.bf16.mxu0 0
        %748 = vmatpush1.bf16.msra.mxu0 %v729
        %749 = vmatprep.subr.bf16.mxu0 0
        %750 = vmatpush1.bf16.msra.mxu0 %v730
        %751 = vmatprep.subr.bf16.mxu0 0
        %752 = vmatpush1.bf16.msra.mxu0 %v731
        %753 = vmatprep.subr.bf16.mxu0 0
        %754 = vmatpush1.bf16.msra.mxu0 %v732
        %755 = vmatprep.subr.bf16.mxu0 0
        %756 = vmatpush1.bf16.msra.mxu0 %v733
        %757 = vmatprep.subr.bf16.mxu0 0
        %758 = vmatpush1.bf16.msra.mxu0 %v734
        %759 = vmatprep.subr.bf16.mxu0 0
        %760 = vmatpush1.bf16.msra.mxu0 0
        %761 = vmatprep.subr.bf16.mxu0 0
        %762 = vmatpush1.bf16.msra.mxu0 0
        %763 = vmatprep.subr.bf16.mxu0 0
        %764 = vmatpush1.bf16.msra.mxu0 0
        %765 = vmatprep.subr.bf16.mxu0 0
        %766 = vmatpush1.bf16.msra.mxu0 0
        %767 = vmatprep.subr.bf16.mxu0 0
        %768 = vmatpush1.bf16.msra.mxu0 0
        %769 = vmatprep.subr.bf16.mxu0 0
        %770 = vmatpush1.bf16.msra.mxu0 0
        %771 = vmatprep.subr.bf16.mxu0 0
        %772 = vmatpush1.bf16.msra.mxu0 0
        %773 = vmatprep.subr.bf16.mxu0 0
        %774 = vmatpush1.bf16.msra.mxu0 0
        %775 = vmatprep.mubr.bf16.mxu0 0
        %776 = vmatmul.mubr.bf16.gmra.mrb[0].mxu0 %v671
        %v777 = vpop.f32.mrb[0].mxu0
        %v778 = vadd.f32 %v693, %v777
        %v779 = vpop.f32.mrb[0].mxu0
        %v780 = vpop.f32.mrb[0].mxu0
        %v781 = vadd.f32 %v693, %v780
        %v782 = vpop.f32.mrb[0].mxu0
        %783 = vdwg.mxu0
        %v784 = vpack.c.bf16 %v781, %v778
        %v785 = vmul.bf16 %v784, 1056980736
        %v786 = vtanh.bf16.pop %v785
        %v787 = vmul.bf16 %v786, 1056980736
        %v788 = vadd.bf16 %v787, 1056980736
        %v789 = vld [vmem:[#allocation7] sm:$0xf]
        %v790 = vld [vmem:[#allocation7 + $0x4] sm:$0xf]
        %v791 = vld [vmem:[#allocation7 + $0x8] sm:$0xf]
        %v792 = vld [vmem:[#allocation7 + $0xc] sm:$0xf]
        %v793 = vld [vmem:[#allocation7 + $0x10] sm:$0xf]
        %v794 = vld [vmem:[#allocation7 + $0x14] sm:$0xf]
        %v795 = vld [vmem:[#allocation7 + $0x18] sm:$0xf]
        %v796 = vld [vmem:[#allocation7 + $0x1c] sm:$0xf]
        %v797 = vld [vmem:[#allocation7 + $0x20] sm:$0xf]
        %v798 = vld [vmem:[#allocation7 + $0x24] sm:$0xf]
        %v799 = vld [vmem:[#allocation7 + $0x28] sm:$0xf]
        %v800 = vld [vmem:[#allocation7 + $0x2c] sm:$0xf]
        %v801 = vld [vmem:[#allocation7 + $0x30] sm:$0xf]
        %v802 = vld [vmem:[#allocation7 + $0x34] sm:$0xf]
        %v803 = vld [vmem:[#allocation7 + $0x38] sm:$0xf]
        %v804 = vld [vmem:[#allocation7 + $0x3c] sm:$0xf]
        %v805 = vld [vmem:[%s6] sm:$0x1]
        %v807 = vlaneseq
        %v808 = vshrl.u32 %v807, 7
        %v809 = vsub.s32 0, %v808
        %v810 = vrot.slane %v805, %v809
        %v828 = vunpack.c.l.b16 %v789
        %v829 = vunpack.c.l.b16 %v790
        %v830 = vunpack.c.l.b16 %v791
        %v831 = vunpack.c.l.b16 %v792
        %v832 = vunpack.c.l.b16 %v793
        %v833 = vunpack.c.l.b16 %v794
        %v834 = vunpack.c.l.b16 %v795
        %v835 = vunpack.c.l.b16 %v796
        %v836 = vunpack.c.l.b16 %v797
        %v837 = vunpack.c.l.b16 %v798
        %v838 = vunpack.c.l.b16 %v799
        %v839 = vunpack.c.l.b16 %v800
        %v840 = vunpack.c.l.b16 %v801
        %v841 = vunpack.c.l.b16 %v802
        %v842 = vunpack.c.l.b16 %v803
        %v843 = vunpack.c.l.b16 %v804
        %v844 = vpack.c.b16 %v829, %v828
        %v845 = vpack.c.b16 %v831, %v830
        %v846 = vpack.c.b16 %v833, %v832
        %v847 = vpack.c.b16 %v835, %v834
        %v848 = vpack.c.b16 %v837, %v836
        %v849 = vpack.c.b16 %v839, %v838
        %v850 = vpack.c.b16 %v841, %v840
        %v851 = vpack.c.b16 %v843, %v842
        %860 = vmatprep.subr.bf16.mxu0 0
        %861 = vmatpush1.bf16.msra.mxu0 %v844
        %862 = vmatprep.subr.bf16.mxu0 0
        %863 = vmatpush1.bf16.msra.mxu0 %v845
        %864 = vmatprep.subr.bf16.mxu0 0
        %865 = vmatpush1.bf16.msra.mxu0 %v846
        %866 = vmatprep.subr.bf16.mxu0 0
        %867 = vmatpush1.bf16.msra.mxu0 %v847
        %868 = vmatprep.subr.bf16.mxu0 0
        %869 = vmatpush1.bf16.msra.mxu0 %v848
        %870 = vmatprep.subr.bf16.mxu0 0
        %871 = vmatpush1.bf16.msra.mxu0 %v849
        %872 = vmatprep.subr.bf16.mxu0 0
        %873 = vmatpush1.bf16.msra.mxu0 %v850
        %874 = vmatprep.subr.bf16.mxu0 0
        %875 = vmatpush1.bf16.msra.mxu0 %v851
        %876 = vmatprep.subr.bf16.mxu0 0
        %877 = vmatpush1.bf16.msra.mxu0 0
        %878 = vmatprep.subr.bf16.mxu0 0
        %879 = vmatpush1.bf16.msra.mxu0 0
        %880 = vmatprep.subr.bf16.mxu0 0
        %881 = vmatpush1.bf16.msra.mxu0 0
        %882 = vmatprep.subr.bf16.mxu0 0
        %883 = vmatpush1.bf16.msra.mxu0 0
        %884 = vmatprep.subr.bf16.mxu0 0
        %885 = vmatpush1.bf16.msra.mxu0 0
        %886 = vmatprep.subr.bf16.mxu0 0
        %887 = vmatpush1.bf16.msra.mxu0 0
        %888 = vmatprep.subr.bf16.mxu0 0
        %889 = vmatpush1.bf16.msra.mxu0 0
        %890 = vmatprep.subr.bf16.mxu0 0
        %891 = vmatpush1.bf16.msra.mxu0 0
        %892 = vmatprep.mubr.bf16.mxu0 0
        %893 = vmatmul.mubr.bf16.gmra.mrb[0].mxu0 %v788
        %v894 = vpop.f32.mrb[0].mxu0
        %v895 = vadd.f32 %v810, %v894
        %v896 = vpop.f32.mrb[0].mxu0
        %v897 = vpop.f32.mrb[0].mxu0
        %v898 = vadd.f32 %v810, %v897
        %v899 = vpop.f32.mrb[0].mxu0
        %900 = vdwg.mxu0
        %v901 = vpack.c.bf16 %v898, %v895
        %v902 = vmul.bf16 %v901, 1056980736
        %v903 = vtanh.bf16.pop %v902
        %v904 = vmul.bf16 %v903, 1056980736
        %v905 = vadd.bf16 %v904, 1056980736
        %v906 = vld [vmem:[#allocation9] sm:$0xf]
        %v907 = vld [vmem:[#allocation9 + $0x4] sm:$0xf]
        %v908 = vld [vmem:[#allocation9 + $0x8] sm:$0xf]
        %v909 = vld [vmem:[#allocation9 + $0xc] sm:$0xf]
        %v910 = vld [vmem:[#allocation9 + $0x10] sm:$0xf]
        %v911 = vld [vmem:[#allocation9 + $0x14] sm:$0xf]
        %v912 = vld [vmem:[#allocation9 + $0x18] sm:$0xf]
        %v913 = vld [vmem:[#allocation9 + $0x1c] sm:$0xf]
        %v914 = vld [vmem:[#allocation9 + $0x20] sm:$0xf]
        %v915 = vld [vmem:[#allocation9 + $0x24] sm:$0xf]
        %v916 = vld [vmem:[#allocation9 + $0x28] sm:$0xf]
        %v917 = vld [vmem:[#allocation9 + $0x2c] sm:$0xf]
        %v918 = vld [vmem:[#allocation9 + $0x30] sm:$0xf]
        %v919 = vld [vmem:[#allocation9 + $0x34] sm:$0xf]
        %v920 = vld [vmem:[#allocation9 + $0x38] sm:$0xf]
        %v921 = vld [vmem:[#allocation9 + $0x3c] sm:$0xf]
        %v922 = vld [vmem:[%s8] sm:$0x1]
        %v924 = vlaneseq
        %v925 = vshrl.u32 %v924, 7
        %v926 = vsub.s32 0, %v925
        %v927 = vrot.slane %v922, %v926
        %v945 = vunpack.c.l.b16 %v906
        %v946 = vunpack.c.l.b16 %v907
        %v947 = vunpack.c.l.b16 %v908
        %v948 = vunpack.c.l.b16 %v909
        %v949 = vunpack.c.l.b16 %v910
        %v950 = vunpack.c.l.b16 %v911
        %v951 = vunpack.c.l.b16 %v912
        %v952 = vunpack.c.l.b16 %v913
        %v953 = vunpack.c.l.b16 %v914
        %v954 = vunpack.c.l.b16 %v915
        %v955 = vunpack.c.l.b16 %v916
        %v956 = vunpack.c.l.b16 %v917
        %v957 = vunpack.c.l.b16 %v918
        %v958 = vunpack.c.l.b16 %v919
        %v959 = vunpack.c.l.b16 %v920
        %v960 = vunpack.c.l.b16 %v921
        %v961 = vpack.c.b16 %v946, %v945
        %v962 = vpack.c.b16 %v948, %v947
        %v963 = vpack.c.b16 %v950, %v949
        %v964 = vpack.c.b16 %v952, %v951
        %v965 = vpack.c.b16 %v954, %v953
        %v966 = vpack.c.b16 %v956, %v955
        %v967 = vpack.c.b16 %v958, %v957
        %v968 = vpack.c.b16 %v960, %v959
        %977 = vmatprep.subr.bf16.mxu0 0
        %978 = vmatpush1.bf16.msra.mxu0 %v961
        %979 = vmatprep.subr.bf16.mxu0 0
        %980 = vmatpush1.bf16.msra.mxu0 %v962
        %981 = vmatprep.subr.bf16.mxu0 0
        %982 = vmatpush1.bf16.msra.mxu0 %v963
        %983 = vmatprep.subr.bf16.mxu0 0
        %984 = vmatpush1.bf16.msra.mxu0 %v964
        %985 = vmatprep.subr.bf16.mxu0 0
        %986 = vmatpush1.bf16.msra.mxu0 %v965
        %987 = vmatprep.subr.bf16.mxu0 0
        %988 = vmatpush1.bf16.msra.mxu0 %v966
        %989 = vmatprep.subr.bf16.mxu0 0
        %990 = vmatpush1.bf16.msra.mxu0 %v967
        %991 = vmatprep.subr.bf16.mxu0 0
        %992 = vmatpush1.bf16.msra.mxu0 %v968
        %993 = vmatprep.subr.bf16.mxu0 0
        %994 = vmatpush1.bf16.msra.mxu0 0
        %995 = vmatprep.subr.bf16.mxu0 0
        %996 = vmatpush1.bf16.msra.mxu0 0
        %997 = vmatprep.subr.bf16.mxu0 0
        %998 = vmatpush1.bf16.msra.mxu0 0
        %999 = vmatprep.subr.bf16.mxu0 0
        %1000 = vmatpush1.bf16.msra.mxu0 0
        %1001 = vmatprep.subr.bf16.mxu0 0
        %1002 = vmatpush1.bf16.msra.mxu0 0
        %1003 = vmatprep.subr.bf16.mxu0 0
        %1004 = vmatpush1.bf16.msra.mxu0 0
        %1005 = vmatprep.subr.bf16.mxu0 0
        %1006 = vmatpush1.bf16.msra.mxu0 0
        %1007 = vmatprep.subr.bf16.mxu0 0
        %1008 = vmatpush1.bf16.msra.mxu0 0
        %1009 = vmatprep.mubr.bf16.mxu0 0
        %1010 = vmatmul.mubr.bf16.gmra.mrb[0].mxu0 %v905
        %v1011 = vpop.f32.mrb[0].mxu0
        %v1012 = vadd.f32 %v927, %v1011
        %v1013 = vpop.f32.mrb[0].mxu0
        %v1014 = vpop.f32.mrb[0].mxu0
        %v1015 = vadd.f32 %v927, %v1014
        %v1016 = vpop.f32.mrb[0].mxu0
        %1017 = vdwg.mxu0
        %v1018 = vpack.c.bf16 %v1015, %v1012
        %v1019 = vmul.bf16 %v1018, 1056980736
        %v1020 = vtanh.bf16.pop %v1019
        %v1021 = vmul.bf16 %v1020, 1056980736
        %v1022 = vadd.bf16 %v1021, 1056980736
        %v1023 = vld [vmem:[#allocation10] sm:$0xf]
        %v1024 = vld [vmem:[#allocation10 + $0x4] sm:$0xf]
        %v1025 = vld [vmem:[#allocation10 + $0x8] sm:$0xf]
        %v1026 = vld [vmem:[#allocation10 + $0xc] sm:$0xf]
        %v1027 = vld [vmem:[#allocation10 + $0x10] sm:$0xf]
        %v1028 = vld [vmem:[#allocation10 + $0x14] sm:$0xf]
        %v1029 = vld [vmem:[#allocation10 + $0x18] sm:$0xf]
        %v1030 = vld [vmem:[#allocation10 + $0x1c] sm:$0xf]
        %v1031 = vld [vmem:[#allocation10 + $0x20] sm:$0xf]
        %v1032 = vld [vmem:[#allocation10 + $0x24] sm:$0xf]
        %v1033 = vld [vmem:[#allocation10 + $0x28] sm:$0xf]
        %v1034 = vld [vmem:[#allocation10 + $0x2c] sm:$0xf]
        %v1035 = vld [vmem:[#allocation10 + $0x30] sm:$0xf]
        %v1036 = vld [vmem:[#allocation10 + $0x34] sm:$0xf]
        %v1037 = vld [vmem:[#allocation10 + $0x38] sm:$0xf]
        %v1038 = vld [vmem:[#allocation10 + $0x3c] sm:$0xf]
        %v1039 = vld [vmem:[%s10] sm:$0x1]
        %v1041 = vlaneseq
        %v1042 = vshrl.u32 %v1041, 7
        %v1043 = vsub.s32 0, %v1042
        %v1044 = vrot.slane %v1039, %v1043
        %v1062 = vunpack.c.l.b16 %v1023
        %v1063 = vunpack.c.l.b16 %v1024
        %v1064 = vunpack.c.l.b16 %v1025
        %v1065 = vunpack.c.l.b16 %v1026
        %v1066 = vunpack.c.l.b16 %v1027
        %v1067 = vunpack.c.l.b16 %v1028
        %v1068 = vunpack.c.l.b16 %v1029
        %v1069 = vunpack.c.l.b16 %v1030
        %v1070 = vunpack.c.l.b16 %v1031
        %v1071 = vunpack.c.l.b16 %v1032
        %v1072 = vunpack.c.l.b16 %v1033
        %v1073 = vunpack.c.l.b16 %v1034
        %v1074 = vunpack.c.l.b16 %v1035
        %v1075 = vunpack.c.l.b16 %v1036
        %v1076 = vunpack.c.l.b16 %v1037
        %v1077 = vunpack.c.l.b16 %v1038
        %v1078 = vpack.c.b16 %v1063, %v1062
        %v1079 = vpack.c.b16 %v1065, %v1064
        %v1080 = vpack.c.b16 %v1067, %v1066
        %v1081 = vpack.c.b16 %v1069, %v1068
        %v1082 = vpack.c.b16 %v1071, %v1070
        %v1083 = vpack.c.b16 %v1073, %v1072
        %v1084 = vpack.c.b16 %v1075, %v1074
        %v1085 = vpack.c.b16 %v1077, %v1076
        %1094 = vmatprep.subr.bf16.mxu0 0
        %1095 = vmatpush1.bf16.msra.mxu0 %v1078
        %1096 = vmatprep.subr.bf16.mxu0 0
        %1097 = vmatpush1.bf16.msra.mxu0 %v1079
        %1098 = vmatprep.subr.bf16.mxu0 0
        %1099 = vmatpush1.bf16.msra.mxu0 %v1080
        %1100 = vmatprep.subr.bf16.mxu0 0
        %1101 = vmatpush1.bf16.msra.mxu0 %v1081
        %1102 = vmatprep.subr.bf16.mxu0 0
        %1103 = vmatpush1.bf16.msra.mxu0 %v1082
        %1104 = vmatprep.subr.bf16.mxu0 0
        %1105 = vmatpush1.bf16.msra.mxu0 %v1083
        %1106 = vmatprep.subr.bf16.mxu0 0
        %1107 = vmatpush1.bf16.msra.mxu0 %v1084
        %1108 = vmatprep.subr.bf16.mxu0 0
        %1109 = vmatpush1.bf16.msra.mxu0 %v1085
        %1110 = vmatprep.subr.bf16.mxu0 0
        %1111 = vmatpush1.bf16.msra.mxu0 0
        %1112 = vmatprep.subr.bf16.mxu0 0
        %1113 = vmatpush1.bf16.msra.mxu0 0
        %1114 = vmatprep.subr.bf16.mxu0 0
        %1115 = vmatpush1.bf16.msra.mxu0 0
        %1116 = vmatprep.subr.bf16.mxu0 0
        %1117 = vmatpush1.bf16.msra.mxu0 0
        %1118 = vmatprep.subr.bf16.mxu0 0
        %1119 = vmatpush1.bf16.msra.mxu0 0
        %1120 = vmatprep.subr.bf16.mxu0 0
        %1121 = vmatpush1.bf16.msra.mxu0 0
        %1122 = vmatprep.subr.bf16.mxu0 0
        %1123 = vmatpush1.bf16.msra.mxu0 0
        %1124 = vmatprep.subr.bf16.mxu0 0
        %1125 = vmatpush1.bf16.msra.mxu0 0
        %1126 = vmatprep.mubr.bf16.mxu0 0
        %1127 = vmatmul.mubr.bf16.gmra.mrb[0].mxu0 %v1022
        %v1128 = vpop.f32.mrb[0].mxu0
        %v1129 = vadd.f32 %v1044, %v1128
        %v1130 = vpop.f32.mrb[0].mxu0
        %v1131 = vpop.f32.mrb[0].mxu0
        %v1132 = vadd.f32 %v1044, %v1131
        %v1133 = vpop.f32.mrb[0].mxu0
        %1134 = vdwg.mxu0
        %v1135 = vpack.c.bf16 %v1132, %v1129
        %v1136 = vmul.bf16 %v1135, 1056980736
        %v1137 = vtanh.bf16.pop %v1136
        %v1138 = vmul.bf16 %v1137, 1056980736
        %v1139 = vadd.bf16 %v1138, 1056980736
        %v1140 = vld [vmem:[#allocation12] sm:$0xf]
        %v1141 = vld [vmem:[#allocation12 + $0x4] sm:$0xf]
        %v1142 = vld [vmem:[#allocation12 + $0x8] sm:$0xf]
        %v1143 = vld [vmem:[#allocation12 + $0xc] sm:$0xf]
        %v1144 = vld [vmem:[#allocation12 + $0x10] sm:$0xf]
        %v1145 = vld [vmem:[#allocation12 + $0x14] sm:$0xf]
        %v1146 = vld [vmem:[#allocation12 + $0x18] sm:$0xf]
        %v1147 = vld [vmem:[#allocation12 + $0x1c] sm:$0xf]
        %v1148 = vld [vmem:[#allocation12 + $0x20] sm:$0xf]
        %v1149 = vld [vmem:[#allocation12 + $0x24] sm:$0xf]
        %v1150 = vld [vmem:[#allocation12 + $0x28] sm:$0xf]
        %v1151 = vld [vmem:[#allocation12 + $0x2c] sm:$0xf]
        %v1152 = vld [vmem:[#allocation12 + $0x30] sm:$0xf]
        %v1153 = vld [vmem:[#allocation12 + $0x34] sm:$0xf]
        %v1154 = vld [vmem:[#allocation12 + $0x38] sm:$0xf]
        %v1155 = vld [vmem:[#allocation12 + $0x3c] sm:$0xf]
        %v1156 = vld [vmem:[%s12] sm:$0x1]
        %v1158 = vlaneseq
        %v1159 = vshrl.u32 %v1158, 7
        %v1160 = vsub.s32 0, %v1159
        %v1161 = vrot.slane %v1156, %v1160
        %v1179 = vunpack.c.l.b16 %v1140
        %v1180 = vunpack.c.l.b16 %v1141
        %v1181 = vunpack.c.l.b16 %v1142
        %v1182 = vunpack.c.l.b16 %v1143
        %v1183 = vunpack.c.l.b16 %v1144
        %v1184 = vunpack.c.l.b16 %v1145
        %v1185 = vunpack.c.l.b16 %v1146
        %v1186 = vunpack.c.l.b16 %v1147
        %v1187 = vunpack.c.l.b16 %v1148
        %v1188 = vunpack.c.l.b16 %v1149
        %v1189 = vunpack.c.l.b16 %v1150
        %v1190 = vunpack.c.l.b16 %v1151
        %v1191 = vunpack.c.l.b16 %v1152
        %v1192 = vunpack.c.l.b16 %v1153
        %v1193 = vunpack.c.l.b16 %v1154
        %v1194 = vunpack.c.l.b16 %v1155
        %v1195 = vpack.c.b16 %v1180, %v1179
        %v1196 = vpack.c.b16 %v1182, %v1181
        %v1197 = vpack.c.b16 %v1184, %v1183
        %v1198 = vpack.c.b16 %v1186, %v1185
        %v1199 = vpack.c.b16 %v1188, %v1187
        %v1200 = vpack.c.b16 %v1190, %v1189
        %v1201 = vpack.c.b16 %v1192, %v1191
        %v1202 = vpack.c.b16 %v1194, %v1193
        %1211 = vmatprep.subr.bf16.mxu0 0
        %1212 = vmatpush1.bf16.msra.mxu0 %v1195
        %1213 = vmatprep.subr.bf16.mxu0 0
        %1214 = vmatpush1.bf16.msra.mxu0 %v1196
        %1215 = vmatprep.subr.bf16.mxu0 0
        %1216 = vmatpush1.bf16.msra.mxu0 %v1197
        %1217 = vmatprep.subr.bf16.mxu0 0
        %1218 = vmatpush1.bf16.msra.mxu0 %v1198
        %1219 = vmatprep.subr.bf16.mxu0 0
        %1220 = vmatpush1.bf16.msra.mxu0 %v1199
        %1221 = vmatprep.subr.bf16.mxu0 0
        %1222 = vmatpush1.bf16.msra.mxu0 %v1200
        %1223 = vmatprep.subr.bf16.mxu0 0
        %1224 = vmatpush1.bf16.msra.mxu0 %v1201
        %1225 = vmatprep.subr.bf16.mxu0 0
        %1226 = vmatpush1.bf16.msra.mxu0 %v1202
        %1227 = vmatprep.subr.bf16.mxu0 0
        %1228 = vmatpush1.bf16.msra.mxu0 0
        %1229 = vmatprep.subr.bf16.mxu0 0
        %1230 = vmatpush1.bf16.msra.mxu0 0
        %1231 = vmatprep.subr.bf16.mxu0 0
        %1232 = vmatpush1.bf16.msra.mxu0 0
        %1233 = vmatprep.subr.bf16.mxu0 0
        %1234 = vmatpush1.bf16.msra.mxu0 0
        %1235 = vmatprep.subr.bf16.mxu0 0
        %1236 = vmatpush1.bf16.msra.mxu0 0
        %1237 = vmatprep.subr.bf16.mxu0 0
        %1238 = vmatpush1.bf16.msra.mxu0 0
        %1239 = vmatprep.subr.bf16.mxu0 0
        %1240 = vmatpush1.bf16.msra.mxu0 0
        %1241 = vmatprep.subr.bf16.mxu0 0
        %1242 = vmatpush1.bf16.msra.mxu0 0
        %1243 = vmatprep.mubr.bf16.mxu0 0
        %1244 = vmatmul.mubr.bf16.gmra.mrb[0].mxu0 %v1139
        %v1245 = vpop.f32.mrb[0].mxu0
        %v1246 = vadd.f32 %v1161, %v1245
        %v1247 = vpop.f32.mrb[0].mxu0
        %v1248 = vpop.f32.mrb[0].mxu0
        %v1249 = vadd.f32 %v1161, %v1248
        %v1250 = vpop.f32.mrb[0].mxu0
        %1251 = vdwg.mxu0
        %v1252 = vmul.f32 %v1246, 0.5
        %v1253 = vmul.f32 %v1249, 0.5
        %v1254 = vtanh.pop %v1252
        %v1255 = vtanh.pop %v1253
        %v1256 = vmul.f32 %v1254, 0.5
        %v1257 = vmul.f32 %v1255, 0.5
        %v1258 = vadd.f32 %v1256, 0.5
        %v1259 = vadd.f32 %v1257, 0.5
        %v1260 = vsub.f32 %v1258, %v552
        %v1261 = vsub.f32 %v1259, %v553
        %v1262 = vlaneseq
        %v1263 = vand.u32 %v1262, 127
        %vm1264 = vcmp.lt.s32.totalorder %v1263, 16
        %v1265 = vsel %vm1264, %v1260, 0.0
        %v1266 = vsel %vm1264, %v1261, 0.0
        %v1267 = vmul.f32 %v1265, %v1265
        %v1268 = vmul.f32 %v1266, %v1266
        %1269 = vadd.xlane.f32.xlu0 %v1267
        %v1270 = vpop.xlane.xlu0 %1269
        %1271 = vadd.xlane.f32.xlu0 %v1268
        %v1272 = vpop.xlane.xlu0 %1271
        %v1273 = vadd.f32 %v1270, 0.0
        %v1274 = vadd.f32 %v1272, 0.0
        %v1275 = vmul.f32 %v1273, 0.0625
        %v1276 = vmul.f32 %v1274, 0.0625
        %vm1277 = vcmask 7168
        %1278 = vst.msk [vmem:[%s548] sm:$0xff] %vm1277, %v1275
        %1279 = vst.msk [vmem:[%s548 + $0x8] sm:$0xff] %vm1277, %v1276
        %s1280 = smul.u32 2, %s30
        %p1281 = scmp.lt.s32.totalorder %s1280, 3
        %s1282 = scalar_select %p1281, %s1280, 3
        %s1283 = smul.addr %s1282, 8
        %s1284 = scalar_lea.vmem %s13, %s1283
        // Predicated region
        $region101: #{tpu_custom_call.1} parent=71 // pred_check
          %p1285 = pneg %p326
        $region102: #{tpu_custom_call.1} parent=71 // pred_check_branch
          %1287 = sbr.rel (%p1285) target = $region104
        $region103: #{tpu_custom_call.1} parent=71 // pred_region
          %s1288 = smul.u32 2, %s30
        $region104: #{tpu_custom_call.1} parent=71 // pred_fallthru
          _
      $region72: #{tpu_custom_call.1} parent=5 // pred_fallthru
        _
      %p1289 = scmp.le.s32.totalorder 2, %s25
      // Predicated region
      $region105: #{tpu_custom_call.1} parent=5 // pred_check
        %p1290 = pneg %p1289
      $region106: #{tpu_custom_call.1} parent=5 // pred_check_branch
        %1292 = sbr.rel (%p1290) target = $region108
      $region107: #{tpu_custom_call.1} parent=5 // pred_region
        %s1293 = ssub.s32 %s25, 2
        // Predicated region
        $region109: #{tpu_custom_call.1} parent=107 // pred_check
          %p1294 = pneg %p332
        $region110: #{tpu_custom_call.1} parent=107 // pred_check_branch
          %1296 = sbr.rel (%p1294) target = $region112
        $region111: #{tpu_custom_call.1} parent=107 // pred_region
          %s1297 = smul.u32 2, %s31
          %p1298 = scmp.lt.s32.totalorder %s1297, 3
          %s1299 = scalar_select %p1298, %s1297, 3
          %s1300 = smul.addr %s1299, 8
          %s1301 = scalar_lea.vmem %s13, %s1300
        $region112: #{tpu_custom_call.1} parent=107 // pred_fallthru
          _
      $region108: #{tpu_custom_call.1} parent=5 // pred_fallthru
        _
    $region6: #{tpu_custom_call.1} parent=1 // loop_footer
      %s29 = sadd.s32 1, %s25
    $region7: #{tpu_custom_call.1} parent=1 // loop_footer_branch
      %24 = sbr.rel target = $region3
    $region8: #{tpu_custom_call.1} parent=1 // loop_exit
      _
    %1302 = vsyncpa [#allocation3], 1
    %s1303 = scalar_lea.sflag [#allocation3], 1
    %1304 = vsyncpa %s1303, 1
    %1305 = vsyncpa [#allocation5], 1
    %1306 = vsyncpa [#allocation8], 1
    %1307 = vsyncpa [#allocation11], 1

// kernel: tpu_custom_call.1
$region0: #{tpu_custom_call.1}
  #allocation0 [shape = 'u32[]', space=smem, size = 0x4, offset = 0x4, fixed_abs, tag = 'smem constant byte address 0x4 - core index']
  #allocation1 [shape = 'u32[144,128]{1,0:T(1,128)}', space=vmem, size = 0x12000, scoped, tag = 'internal scratch']
  %s0 = inlined_call_operand.hbm [shape: f32[32,128], index: 0, kind: input, shape index: {}]
  %s1 = inlined_call_operand.hbm [shape: bf16[128,128], index: 1, kind: input, shape index: {}]
  %s2 = inlined_call_operand.vmem [shape: f32[1,128], index: 2, kind: input, shape index: {}]
  %s3 = inlined_call_operand.hbm [shape: bf16[128,128], index: 3, kind: input, shape index: {}]
  %s4 = inlined_call_operand.vmem [shape: f32[1,128], index: 4, kind: input, shape index: {}]
  %s5 = inlined_call_operand.hbm [shape: bf16[128,128], index: 5, kind: input, shape index: {}]
  %s6 = inlined_call_operand.vmem [shape: f32[1,128], index: 6, kind: input, shape index: {}]
  %s7 = inlined_call_operand.hbm [shape: bf16[128,128], index: 7, kind: input, shape index: {}]
  %s8 = inlined_call_operand.vmem [shape: f32[1,128], index: 8, kind: input, shape index: {}]
  %s9 = inlined_call_operand.hbm [shape: bf16[128,128], index: 9, kind: input, shape index: {}]
  %s10 = inlined_call_operand.vmem [shape: f32[1,128], index: 10, kind: input, shape index: {}]
  %s11 = inlined_call_operand.hbm [shape: bf16[128,128], index: 11, kind: input, shape index: {}]
  %s12 = inlined_call_operand.vmem [shape: f32[1,128], index: 12, kind: input, shape index: {}]
  %s13 = inlined_call_operand.vmem [shape: f32[32,1], index: 13, kind: output, shape index: {}]
  %s14 = sld [smem:[#allocation0]]
  $region113: #{tpu_custom_call.1} parent=0
    _
  %s16 = ssub.s32 1, %s14
  %s17 = scalar_select 0, %s16, %s14
  $region1: #{tpu_custom_call.1} parent=0
    #allocation2 [shape = 'u8[16384]{0}', space=vmem, size = 0x4000, scoped, tag = 'input window, operand 0']
    #allocation3 [shape = 's32[2]{0}', space=sflag, size = 0x8, scoped, tag = 'scoped memory for tpu_custom_call.1']
    #allocation4 [shape = 'u8[32768]{0}', space=vmem, size = 0x8000, scoped, tag = 'input window, operand 1, single buffered']
    #allocation5 [shape = 's32[1]{0}', space=sflag, size = 0x4, scoped, tag = 'scoped memory for tpu_custom_call.1']
    #allocation6 [shape = 'u8[32768]{0}', space=vmem, size = 0x8000, scoped, tag = 'input window, operand 3, single buffered']
    #allocation7 [shape = 'u8[32768]{0}', space=vmem, size = 0x8000, scoped, tag = 'input window, operand 5, single buffered']
    #allocation8 [shape = 's32[1]{0}', space=sflag, size = 0x4, scoped, tag = 'scoped memory for tpu_custom_call.1']
    #allocation9 [shape = 'u8[32768]{0}', space=vmem, size = 0x8000, scoped, tag = 'input window, operand 7, single buffered']
    #allocation10 [shape = 'u8[32768]{0}', space=vmem, size = 0x8000, scoped, tag = 'input window, operand 9, single buffered']
    #allocation11 [shape = 's32[1]{0}', space=sflag, size = 0x4, scoped, tag = 'scoped memory for tpu_custom_call.1']
    #allocation12 [shape = 'u8[32768]{0}', space=vmem, size = 0x8000, scoped, tag = 'input window, operand 11, single buffered']
    %18 = vsyncpa [#allocation3], 0
    %s19 = scalar_lea.sflag [#allocation3], 1
    %20 = vsyncpa %s19, 0
    %21 = vsyncpa [#allocation5], 0
    %22 = vsyncpa [#allocation8], 0
    %23 = vsyncpa [#allocation11], 0
    loop: start=0, step=1, limit=4
    $region2: #{tpu_custom_call.1} parent=1 // loop_pre_header
      _
    $region3: #{tpu_custom_call.1} parent=1 // loop_header
      %s25 = sphi 0, %s29
      %p26 = scmp.ge.s32.totalorder %s25, 4
      %s35 = sphi 0, %s37
      %s38 = sphi 0, %s35
      %s39 = sphi 0, %s38
      %s55 = sphi 0, %s39
      %s59 = sphi 0, %s59
      %s61 = sphi 0, %s59
      %s62 = sphi 0, %s61
      %s76 = sphi 0, %s62
      %s80 = sphi 0, %s80
      %s82 = sphi 0, %s80
      %s83 = sphi 0, %s82
      %s97 = sphi 0, %s83
      %s101 = sphi 0, %s101
      %s103 = sphi 0, %s101
      %s104 = sphi 0, %s103
      %s118 = sphi 0, %s104
      %s122 = sphi 0, %s122
      %s124 = sphi 0, %s122
      %s125 = sphi 0, %s124
      %s139 = sphi 0, %s125
      %s143 = sphi 0, %s143
      %s145 = sphi 0, %s143
      %s146 = sphi 0, %s145
      %s160 = sphi 0, %s146
      %s164 = sphi 0, %s164
      %s166 = sphi 0, %s164
      %s167 = sphi 0, %s166
      %s181 = sphi 0, %s167
      %s185 = sphi 0, %s185
      %s187 = sphi 0, %s185
      %s188 = sphi 0, %s187
      %s202 = sphi 0, %s188
      %s206 = sphi 0, %s206
      %s208 = sphi 0, %s206
      %s209 = sphi 0, %s208
      %s223 = sphi 0, %s209
      %s227 = sphi 0, %s227
      %s229 = sphi 0, %s227
      %s230 = sphi 0, %s229
      %s244 = sphi 0, %s230
      %s248 = sphi 0, %s248
      %s250 = sphi 0, %s248
      %s251 = sphi 0, %s250
      %s265 = sphi 0, %s251
      %s269 = sphi 0, %s269
      %s271 = sphi 0, %s269
      %s272 = sphi 0, %s271
      %s286 = sphi 0, %s272
      %s290 = sphi 0, %s290
      %s292 = sphi 0, %s290
      %s293 = sphi 0, %s292
      %s307 = sphi 0, %s293
      %s313 = sphi 0, %s315
      %s316 = sphi 0, %s313
      %s317 = sphi 0, %s316
      %s333 = sphi 0, %s317
    $region4: #{tpu_custom_call.1} parent=1 // loop_header_branch
      %28 = sbr.rel (%p26) target = $region8
    $region5: #{tpu_custom_call.1} parent=1 // loop_body
      %s30 = ssub.s32 %s25, 1
      %s31 = ssub.s32 %s25, 2
      %s32 = sadd.s32 %s25, 1
      %s33 = ssub.s32 %s25, %s32
      %p34 = scmp.eq.s32.totalorder %s33, 0
      %s36 = sadd.s32 %s35, 1
      %s37 = scalar_select %p34, %s35, %s36
      %p40 = pneg %p34
      %p41 = scmp.eq.s32.totalorder %s25, 1
      %p42 = por %p40, %p41
      %p43 = scmp.ne.s32.totalorder %s35, %s38
      %p44 = scmp.eq.s32.totalorder %s25, 0
      %p45 = por %p43, %p44
      %p46 = scmp.ne.s32.totalorder %s35, %s38
      %p47 = scmp.eq.s32.totalorder %s30, 1
      %p48 = por %p46, %p47
      %p49 = scmp.ne.s32.totalorder %s38, %s39
      %p50 = scmp.eq.s32.totalorder %s30, 0
      %p51 = por %p49, %p50
      %p52 = scmp.ne.s32.totalorder %s38, %s39
      %p53 = scmp.eq.s32.totalorder %s31, 1
      %p54 = por %p52, %p53
      %p56 = scmp.ne.s32.totalorder %s39, %s55
      %p57 = scmp.eq.s32.totalorder %s31, 0
      %p58 = por %p56, %p57
      %s60 = sadd.s32 %s59, 1
      %p63 = scmp.eq.s32.totalorder %s25, 1
      %p64 = scmp.ne.s32.totalorder %s59, %s61
      %p65 = scmp.eq.s32.totalorder %s25, 0
      %p66 = por %p64, %p65
      %p67 = scmp.ne.s32.totalorder %s59, %s61
      %p68 = scmp.eq.s32.totalorder %s30, 1
      %p69 = por %p67, %p68
      %p70 = scmp.ne.s32.totalorder %s61, %s62
      %p71 = scmp.eq.s32.totalorder %s30, 0
      %p72 = por %p70, %p71
      %p73 = scmp.ne.s32.totalorder %s61, %s62
      %p74 = scmp.eq.s32.totalorder %s31, 1
      %p75 = por %p73, %p74
      %p77 = scmp.ne.s32.totalorder %s62, %s76
      %p78 = scmp.eq.s32.totalorder %s31, 0
      %p79 = por %p77, %p78
      %s81 = sadd.s32 %s80, 1
      %p84 = scmp.eq.s32.totalorder %s25, 1
      %p85 = scmp.ne.s32.totalorder %s80, %s82
      %p86 = scmp.eq.s32.totalorder %s25, 0
      %p87 = por %p85, %p86
      %p88 = scmp.ne.s32.totalorder %s80, %s82
      %p89 = scmp.eq.s32.totalorder %s30, 1
      %p90 = por %p88, %p89
      %p91 = scmp.ne.s32.totalorder %s82, %s83
      %p92 = scmp.eq.s32.totalorder %s30, 0
      %p93 = por %p91, %p92
      %p94 = scmp.ne.s32.totalorder %s82, %s83
      %p95 = scmp.eq.s32.totalorder %s31, 1
      %p96 = por %p94, %p95
      %p98 = scmp.ne.s32.totalorder %s83, %s97
      %p99 = scmp.eq.s32.totalorder %s31, 0
      %p100 = por %p98, %p99
      %s102 = sadd.s32 %s101, 1
      %p105 = scmp.eq.s32.totalorder %s25, 1
      %p106 = scmp.ne.s32.totalorder %s101, %s103
      %p107 = scmp.eq.s32.totalorder %s25, 0
      %p108 = por %p106, %p107
      %p109 = scmp.ne.s32.totalorder %s101, %s103
      %p110 = scmp.eq.s32.totalorder %s30, 1
      %p111 = por %p109, %p110
      %p112 = scmp.ne.s32.totalorder %s103, %s104
      %p113 = scmp.eq.s32.totalorder %s30, 0
      %p114 = por %p112, %p113
      %p115 = scmp.ne.s32.totalorder %s103, %s104
      %p116 = scmp.eq.s32.totalorder %s31, 1
      %p117 = por %p115, %p116
      %p119 = scmp.ne.s32.totalorder %s104, %s118
      %p120 = scmp.eq.s32.totalorder %s31, 0
      %p121 = por %p119, %p120
      %s123 = sadd.s32 %s122, 1
      %p126 = scmp.eq.s32.totalorder %s25, 1
      %p127 = scmp.ne.s32.totalorder %s122, %s124
      %p128 = scmp.eq.s32.totalorder %s25, 0
      %p129 = por %p127, %p128
      %p130 = scmp.ne.s32.totalorder %s122, %s124
      %p131 = scmp.eq.s32.totalorder %s30, 1
      %p132 = por %p130, %p131
      %p133 = scmp.ne.s32.totalorder %s124, %s125
      %p134 = scmp.eq.s32.totalorder %s30, 0
      %p135 = por %p133, %p134
      %p136 = scmp.ne.s32.totalorder %s124, %s125
      %p137 = scmp.eq.s32.totalorder %s31, 1
      %p138 = por %p136, %p137
      %p140 = scmp.ne.s32.totalorder %s125, %s139
      %p141 = scmp.eq.s32.totalorder %s31, 0
      %p142 = por %p140, %p141
      %s144 = sadd.s32 %s143, 1
      %p147 = scmp.eq.s32.totalorder %s25, 1
      %p148 = scmp.ne.s32.totalorder %s143, %s145
      %p149 = scmp.eq.s32.totalorder %s25, 0
      %p150 = por %p148, %p149
      %p151 = scmp.ne.s32.totalorder %s143, %s145
      %p152 = scmp.eq.s32.totalorder %s30, 1
      %p153 = por %p151, %p152
      %p154 = scmp.ne.s32.totalorder %s145, %s146
      %p155 = scmp.eq.s32.totalorder %s30, 0
      %p156 = por %p154, %p155
      %p157 = scmp.ne.s32.totalorder %s145, %s146
      %p158 = scmp.eq.s32.totalorder %s31, 1
      %p159 = por %p157, %p158
      %p161 = scmp.ne.s32.totalorder %s146, %s160
      %p162 = scmp.eq.s32.totalorder %s31, 0
      %p163 = por %p161, %p162
      %s165 = sadd.s32 %s164, 1
      %p168 = scmp.eq.s32.totalorder %s25, 1
      %p169 = scmp.ne.s32.totalorder %s164, %s166
      %p170 = scmp.eq.s32.totalorder %s25, 0
      %p171 = por %p169, %p170
      %p172 = scmp.ne.s32.totalorder %s164, %s166
      %p173 = scmp.eq.s32.totalorder %s30, 1
      %p174 = por %p172, %p173
      %p175 = scmp.ne.s32.totalorder %s166, %s167
      %p176 = scmp.eq.s32.totalorder %s30, 0
      %p177 = por %p175, %p176
      %p178 = scmp.ne.s32.totalorder %s166, %s167
      %p179 = scmp.eq.s32.totalorder %s31, 1
      %p180 = por %p178, %p179
      %p182 = scmp.ne.s32.totalorder %s167, %s181
      %p183 = scmp.eq.s32.totalorder %s31, 0
      %p184 = por %p182, %p183
      %s186 = sadd.s32 %s185, 1
      %p189 = scmp.eq.s32.totalorder %s25, 1
      %p190 = scmp.ne.s32.totalorder %s185, %s187
      %p191 = scmp.eq.s32.totalorder %s25, 0
      %p192 = por %p190, %p191
      %p193 = scmp.ne.s32.totalorder %s185, %s187
      %p194 = scmp.eq.s32.totalorder %s30, 1
      %p195 = por %p193, %p194
      %p196 = scmp.ne.s32.totalorder %s187, %s188
      %p197 = scmp.eq.s32.totalorder %s30, 0
      %p198 = por %p196, %p197
      %p199 = scmp.ne.s32.totalorder %s187, %s188
      %p200 = scmp.eq.s32.totalorder %s31, 1
      %p201 = por %p199, %p200
      %p203 = scmp.ne.s32.totalorder %s188, %s202
      %p204 = scmp.eq.s32.totalorder %s31, 0
      %p205 = por %p203, %p204
      %s207 = sadd.s32 %s206, 1
      %p210 = scmp.eq.s32.totalorder %s25, 1
      %p211 = scmp.ne.s32.totalorder %s206, %s208
      %p212 = scmp.eq.s32.totalorder %s25, 0
      %p213 = por %p211, %p212
      %p214 = scmp.ne.s32.totalorder %s206, %s208
      %p215 = scmp.eq.s32.totalorder %s30, 1
      %p216 = por %p214, %p215
      %p217 = scmp.ne.s32.totalorder %s208, %s209
      %p218 = scmp.eq.s32.totalorder %s30, 0
      %p219 = por %p217, %p218
      %p220 = scmp.ne.s32.totalorder %s208, %s209
      %p221 = scmp.eq.s32.totalorder %s31, 1
      %p222 = por %p220, %p221
      %p224 = scmp.ne.s32.totalorder %s209, %s223
      %p225 = scmp.eq.s32.totalorder %s31, 0
      %p226 = por %p224, %p225
      %s228 = sadd.s32 %s227, 1
      %p231 = scmp.eq.s32.totalorder %s25, 1
      %p232 = scmp.ne.s32.totalorder %s227, %s229
      %p233 = scmp.eq.s32.totalorder %s25, 0
      %p234 = por %p232, %p233
      %p235 = scmp.ne.s32.totalorder %s227, %s229
      %p236 = scmp.eq.s32.totalorder %s30, 1
      %p237 = por %p235, %p236
      %p238 = scmp.ne.s32.totalorder %s229, %s230
      %p239 = scmp.eq.s32.totalorder %s30, 0
      %p240 = por %p238, %p239
      %p241 = scmp.ne.s32.totalorder %s229, %s230
      %p242 = scmp.eq.s32.totalorder %s31, 1
      %p243 = por %p241, %p242
      %p245 = scmp.ne.s32.totalorder %s230, %s244
      %p246 = scmp.eq.s32.totalorder %s31, 0
      %p247 = por %p245, %p246
      %s249 = sadd.s32 %s248, 1
      %p252 = scmp.eq.s32.totalorder %s25, 1
      %p253 = scmp.ne.s32.totalorder %s248, %s250
      %p254 = scmp.eq.s32.totalorder %s25, 0
      %p255 = por %p253, %p254
      %p256 = scmp.ne.s32.totalorder %s248, %s250
      %p257 = scmp.eq.s32.totalorder %s30, 1
      %p258 = por %p256, %p257
      %p259 = scmp.ne.s32.totalorder %s250, %s251
      %p260 = scmp.eq.s32.totalorder %s30, 0
      %p261 = por %p259, %p260
      %p262 = scmp.ne.s32.totalorder %s250, %s251
      %p263 = scmp.eq.s32.totalorder %s31, 1
      %p264 = por %p262, %p263
      %p266 = scmp.ne.s32.totalorder %s251, %s265
      %p267 = scmp.eq.s32.totalorder %s31, 0
      %p268 = por %p266, %p267
      %s270 = sadd.s32 %s269, 1
      %p273 = scmp.eq.s32.totalorder %s25, 1
      %p274 = scmp.ne.s32.totalorder %s269, %s271
      %p275 = scmp.eq.s32.totalorder %s25, 0
      %p276 = por %p274, %p275
      %p277 = scmp.ne.s32.totalorder %s269, %s271
      %p278 = scmp.eq.s32.totalorder %s30, 1
      %p279 = por %p277, %p278
      %p280 = scmp.ne.s32.totalorder %s271, %s272
      %p281 = scmp.eq.s32.totalorder %s30, 0
      %p282 = por %p280, %p281
      %p283 = scmp.ne.s32.totalorder %s271, %s272
      %p284 = scmp.eq.s32.totalorder %s31, 1
      %p285 = por %p283, %p284
      %p287 = scmp.ne.s32.totalorder %s272, %s286
      %p288 = scmp.eq.s32.totalorder %s31, 0
      %p289 = por %p287, %p288
      %s291 = sadd.s32 %s290, 1
      %p294 = scmp.eq.s32.totalorder %s25, 1
      %p295 = scmp.ne.s32.totalorder %s290, %s292
      %p296 = scmp.eq.s32.totalorder %s25, 0
      %p297 = por %p295, %p296
      %p298 = scmp.ne.s32.totalorder %s290, %s292
      %p299 = scmp.eq.s32.totalorder %s30, 1
      %p300 = por %p298, %p299
      %p301 = scmp.ne.s32.totalorder %s292, %s293
      %p302 = scmp.eq.s32.totalorder %s30, 0
      %p303 = por %p301, %p302
      %p304 = scmp.ne.s32.totalorder %s292, %s293
      %p305 = scmp.eq.s32.totalorder %s31, 1
      %p306 = por %p304, %p305
      %p308 = scmp.ne.s32.totalorder %s293, %s307
      %p309 = scmp.eq.s32.totalorder %s31, 0
      %p310 = por %p308, %p309
      %s311 = ssub.s32 %s25, %s32
      %p312 = scmp.eq.s32.totalorder %s311, 0
      %s314 = sadd.s32 %s313, 1
      %s315 = scalar_select %p312, %s313, %s314
      %p318 = pneg %p312
      %p319 = scmp.eq.s32.totalorder %s25, 1
      %p320 = por %p318, %p319
      %p321 = scmp.ne.s32.totalorder %s313, %s316
      %p322 = scmp.eq.s32.totalorder %s25, 0
      %p323 = por %p321, %p322
      %p324 = scmp.ne.s32.totalorder %s313, %s316
      %p325 = scmp.eq.s32.totalorder %s30, 1
      %p326 = por %p324, %p325
      %p327 = scmp.ne.s32.totalorder %s316, %s317
      %p328 = scmp.eq.s32.totalorder %s30, 0
      %p329 = por %p327, %p328
      %p330 = scmp.ne.s32.totalorder %s316, %s317
      %p331 = scmp.eq.s32.totalorder %s31, 1
      %p332 = por %p330, %p331
      %p334 = scmp.ne.s32.totalorder %s317, %s333
      %p335 = scmp.eq.s32.totalorder %s31, 0
      %p336 = por %p334, %p335
      %p337 = scmp.le.s32.totalorder 1, %s25
      %p338 = scmp.lt.s32.totalorder %s25, 3
      %p339 = pnand %p337, %p338
      %p340 = pneg %p339
      // Predicated region
      $region9: #{tpu_custom_call.1} parent=5 // pred_check
        _
      $region10: #{tpu_custom_call.1} parent=5 // pred_check_branch
        %342 = sbr.rel (%p339) target = $region12
      $region11: #{tpu_custom_call.1} parent=5 // pred_region
        %s343 = ssub.s32 %s25, 1
        // Predicated region
        $region13: #{tpu_custom_call.1} parent=11 // pred_check
          %p344 = pneg %p72
        $region14: #{tpu_custom_call.1} parent=11 // pred_check_branch
          %346 = sbr.rel (%p344) target = $region16
        $region15: #{tpu_custom_call.1} parent=11 // pred_region
          %s348 = ssub.s32 1024, 1024
          %349 = vsyncadd [#allocation5], %s348
          %s350 = sshll.u32 [#allocation4], 4
          %s351 = int_to_ptr.vmem [resolvable:$true] %s350
          %356 = dma.hbm_to_vmem [thread:$0]  %s1, 1024, %s351, [#allocation5], 64, 64, 4
        $region16: #{tpu_custom_call.1} parent=11 // pred_fallthru
          _
        // Predicated region
        $region17: #{tpu_custom_call.1} parent=11 // pred_check
          %p357 = pneg %p93
        $region18: #{tpu_custom_call.1} parent=11 // pred_check_branch
          %359 = sbr.rel (%p357) target = $region20
        $region19: #{tpu_custom_call.1} parent=11 // pred_region
          _
        $region20: #{tpu_custom_call.1} parent=11 // pred_fallthru
          _
        // Predicated region
        $region21: #{tpu_custom_call.1} parent=11 // pred_check
          %p360 = pneg %p114
        $region22: #{tpu_custom_call.1} parent=11 // pred_check_branch
          %362 = sbr.rel (%p360) target = $region24
        $region23: #{tpu_custom_call.1} parent=11 // pred_region
          %s364 = ssub.s32 1024, 1024
          %365 = vsyncadd [#allocation5], %s364
          %s366 = sshll.u32 [#allocation6], 4
          %s367 = int_to_ptr.vmem [resolvable:$true] %s366
          %372 = dma.hbm_to_vmem [thread:$0]  %s3, 1024, %s367, [#allocation5], 64, 64, 4
        $region24: #{tpu_custom_call.1} parent=11 // pred_fallthru
          _
        // Predicated region
        $region25: #{tpu_custom_call.1} parent=11 // pred_check
          %p373 = pneg %p135
        $region26: #{tpu_custom_call.1} parent=11 // pred_check_branch
          %375 = sbr.rel (%p373) target = $region28
        $region27: #{tpu_custom_call.1} parent=11 // pred_region
          _
        $region28: #{tpu_custom_call.1} parent=11 // pred_fallthru
          _
        // Predicated region
        $region29: #{tpu_custom_call.1} parent=11 // pred_check
          %p376 = pneg %p156
        $region30: #{tpu_custom_call.1} parent=11 // pred_check_branch
          %378 = sbr.rel (%p376) target = $region32
        $region31: #{tpu_custom_call.1} parent=11 // pred_region
          %s380 = ssub.s32 1024, 1024
          %381 = vsyncadd [#allocation8], %s380
          %s382 = sshll.u32 [#allocation7], 4
          %s383 = int_to_ptr.vmem [resolvable:$true] %s382
          %388 = dma.hbm_to_vmem [thread:$0]  %s5, 1024, %s383, [#allocation8], 64, 64, 4
        $region32: #{tpu_custom_call.1} parent=11 // pred_fallthru
          _
        // Predicated region
        $region33: #{tpu_custom_call.1} parent=11 // pred_check
          %p389 = pneg %p177
        $region34: #{tpu_custom_call.1} parent=11 // pred_check_branch
          %391 = sbr.rel (%p389) target = $region36
        $region35: #{tpu_custom_call.1} parent=11 // pred_region
          _
        $region36: #{tpu_custom_call.1} parent=11 // pred_fallthru
          _
        // Predicated region
        $region37: #{tpu_custom_call.1} parent=11 // pred_check
          %p392 = pneg %p198
        $region38: #{tpu_custom_call.1} parent=11 // pred_check_branch
          %394 = sbr.rel (%p392) target = $region40
        $region39: #{tpu_custom_call.1} parent=11 // pred_region
          %s396 = ssub.s32 1024, 1024
          %397 = vsyncadd [#allocation8], %s396
          %s398 = sshll.u32 [#allocation9], 4
          %s399 = int_to_ptr.vmem [resolvable:$true] %s398
          %404 = dma.hbm_to_vmem [thread:$0]  %s7, 1024, %s399, [#allocation8], 64, 64, 4
        $region40: #{tpu_custom_call.1} parent=11 // pred_fallthru
          _
        // Predicated region
        $region41: #{tpu_custom_call.1} parent=11 // pred_check
          %p405 = pneg %p219
        $region42: #{tpu_custom_call.1} parent=11 // pred_check_branch
          %407 = sbr.rel (%p405) target = $region44
        $region43: #{tpu_custom_call.1} parent=11 // pred_region
          _
        $region44: #{tpu_custom_call.1} parent=11 // pred_fallthru
          _
        // Predicated region
        $region45: #{tpu_custom_call.1} parent=11 // pred_check
          %p408 = pneg %p240
        $region46: #{tpu_custom_call.1} parent=11 // pred_check_branch
          %410 = sbr.rel (%p408) target = $region48
        $region47: #{tpu_custom_call.1} parent=11 // pred_region
          %s412 = ssub.s32 1024, 1024
          %413 = vsyncadd [#allocation11], %s412
          %s414 = sshll.u32 [#allocation10], 4
          %s415 = int_to_ptr.vmem [resolvable:$true] %s414
          %420 = dma.hbm_to_vmem [thread:$0]  %s9, 1024, %s415, [#allocation11], 64, 64, 4
        $region48: #{tpu_custom_call.1} parent=11 // pred_fallthru
          _
        // Predicated region
        $region49: #{tpu_custom_call.1} parent=11 // pred_check
          %p421 = pneg %p261
        $region50: #{tpu_custom_call.1} parent=11 // pred_check_branch
          %423 = sbr.rel (%p421) target = $region52
        $region51: #{tpu_custom_call.1} parent=11 // pred_region
          _
        $region52: #{tpu_custom_call.1} parent=11 // pred_fallthru
          _
        // Predicated region
        $region53: #{tpu_custom_call.1} parent=11 // pred_check
          %p424 = pneg %p282
        $region54: #{tpu_custom_call.1} parent=11 // pred_check_branch
          %426 = sbr.rel (%p424) target = $region56
        $region55: #{tpu_custom_call.1} parent=11 // pred_region
          %s428 = ssub.s32 1024, 1024
          %429 = vsyncadd [#allocation11], %s428
          %s430 = sshll.u32 [#allocation12], 4
          %s431 = int_to_ptr.vmem [resolvable:$true] %s430
          %436 = dma.hbm_to_vmem [thread:$0]  %s11, 1024, %s431, [#allocation11], 64, 64, 4
        $region56: #{tpu_custom_call.1} parent=11 // pred_fallthru
          _
        // Predicated region
        $region57: #{tpu_custom_call.1} parent=11 // pred_check
          %p437 = pneg %p303
        $region58: #{tpu_custom_call.1} parent=11 // pred_check_branch
          %439 = sbr.rel (%p437) target = $region60
        $region59: #{tpu_custom_call.1} parent=11 // pred_region
          _
        $region60: #{tpu_custom_call.1} parent=11 // pred_fallthru
          _
      $region12: #{tpu_custom_call.1} parent=5 // pred_fallthru
        _
      %p440 = scmp.lt.s32.totalorder %s25, 2
      // Predicated region
      $region61: #{tpu_custom_call.1} parent=5 // pred_check
        %p441 = pneg %p440
      $region62: #{tpu_custom_call.1} parent=5 // pred_check_branch
        %443 = sbr.rel (%p441) target = $region64
      $region63: #{tpu_custom_call.1} parent=5 // pred_region
        // Predicated region
        $region65: #{tpu_custom_call.1} parent=63 // pred_check
          %p444 = pneg %p45
        $region66: #{tpu_custom_call.1} parent=63 // pred_check_branch
          %446 = sbr.rel (%p444) target = $region68
        $region67: #{tpu_custom_call.1} parent=63 // pred_region
          %s447 = sand.u32 %s35, 1
          %s448 = scalar_lea.sflag [#allocation3], %s447
          %s449 = sand.u32 %s35, 1
          %s450 = smul.addr %s449, 16
          %s451 = scalar_lea.vmem [#allocation2], %s450
          %s452 = smul.u32 2, %s25
          %s454 = ssub.s32 256, 256
          %455 = vsyncadd %s448, %s454
          %s456 = smul.addr %s452, 128
          %s457 = scalar_lea.hbm %s0, %s456
          %s458 = sshll.u32 %s451, 4
          %s459 = int_to_ptr.vmem [resolvable:$true] %s458
          %464 = dma.hbm_to_vmem [thread:$0]  %s457, 256, %s459, %s448, 128, 128, 8
        $region68: #{tpu_custom_call.1} parent=63 // pred_fallthru
          _
      $region64: #{tpu_custom_call.1} parent=5 // pred_fallthru
        _
      %p465 = scmp.le.s32.totalorder 1, %s25
      %p466 = scmp.lt.s32.totalorder %s25, 3
      %p467 = pnand %p465, %p466
      %p468 = pneg %p467
      // Predicated region
      $region69: #{tpu_custom_call.1} parent=5 // pred_check
        _
      $region70: #{tpu_custom_call.1} parent=5 // pred_check_branch
        %470 = sbr.rel (%p467) target = $region72
      $region71: #{tpu_custom_call.1} parent=5 // pred_region
        %s471 = ssub.s32 %s25, 1
        %s472 = sand.u32 %s38, 1
        %s473 = scalar_lea.sflag [#allocation3], %s472
        %s474 = sand.u32 %s38, 1
        %s475 = smul.addr %s474, 16
        %s476 = scalar_lea.vmem [#allocation2], %s475
        // Predicated region
        $region73: #{tpu_custom_call.1} parent=71 // pred_check
          %p477 = pneg %p51
        $region74: #{tpu_custom_call.1} parent=71 // pred_check_branch
          %479 = sbr.rel (%p477) target = $region76
        $region75: #{tpu_custom_call.1} parent=71 // pred_region
          %480 = dma.done %s473, 256
        $region76: #{tpu_custom_call.1} parent=71 // pred_fallthru
          _
        // Predicated region
        $region77: #{tpu_custom_call.1} parent=71 // pred_check
          %p481 = pneg %p72
        $region78: #{tpu_custom_call.1} parent=71 // pred_check_branch
          %483 = sbr.rel (%p481) target = $region80
        $region79: #{tpu_custom_call.1} parent=71 // pred_region
          %484 = dma.done [#allocation5], 1024
        $region80: #{tpu_custom_call.1} parent=71 // pred_fallthru
          _
        // Predicated region
        $region81: #{tpu_custom_call.1} parent=71 // pred_check
          %p485 = pneg %p114
        $region82: #{tpu_custom_call.1} parent=71 // pred_check_branch
          %487 = sbr.rel (%p485) target = $region84
        $region83: #{tpu_custom_call.1} parent=71 // pred_region
          %488 = dma.done [#allocation5], 1024
        $region84: #{tpu_custom_call.1} parent=71 // pred_fallthru
          _
        // Predicated region
        $region85: #{tpu_custom_call.1} parent=71 // pred_check
          %p489 = pneg %p156
        $region86: #{tpu_custom_call.1} parent=71 // pred_check_branch
          %491 = sbr.rel (%p489) target = $region88
        $region87: #{tpu_custom_call.1} parent=71 // pred_region
          %492 = dma.done [#allocation8], 1024
        $region88: #{tpu_custom_call.1} parent=71 // pred_fallthru
          _
        // Predicated region
        $region89: #{tpu_custom_call.1} parent=71 // pred_check
          %p493 = pneg %p198
        $region90: #{tpu_custom_call.1} parent=71 // pred_check_branch
          %495 = sbr.rel (%p493) target = $region92
        $region91: #{tpu_custom_call.1} parent=71 // pred_region
          %496 = dma.done [#allocation8], 1024
        $region92: #{tpu_custom_call.1} parent=71 // pred_fallthru
          _
        // Predicated region
        $region93: #{tpu_custom_call.1} parent=71 // pred_check
          %p497 = pneg %p240
        $region94: #{tpu_custom_call.1} parent=71 // pred_check_branch
          %499 = sbr.rel (%p497) target = $region96
        $region95: #{tpu_custom_call.1} parent=71 // pred_region
          %500 = dma.done [#allocation11], 1024
        $region96: #{tpu_custom_call.1} parent=71 // pred_fallthru
          _
        // Predicated region
        $region97: #{tpu_custom_call.1} parent=71 // pred_check
          %p501 = pneg %p282
        $region98: #{tpu_custom_call.1} parent=71 // pred_check_branch
          %503 = sbr.rel (%p501) target = $region100
        $region99: #{tpu_custom_call.1} parent=71 // pred_region
          %504 = dma.done [#allocation11], 1024
        $region100: #{tpu_custom_call.1} parent=71 // pred_fallthru
          _
        %s505 = sand.u32 %s38, 1
        %s506 = scalar_lea.sflag [#allocation3], %s505
        %s507 = sand.u32 %s38, 1
        %s508 = smul.addr %s507, 16
        %s509 = scalar_lea.vmem [#allocation2], %s508
        %p510 = pneg %p51
        %p511 = pneg %p48
        %p512 = pneg %p72
        %p513 = pneg %p69
        %p514 = pneg %p93
        %p515 = pneg %p90
        %p516 = pneg %p114
        %p517 = pneg %p111
        %p518 = pneg %p135
        %p519 = pneg %p132
        %p520 = pneg %p156
        %p521 = pneg %p153
        %p522 = pneg %p177
        %p523 = pneg %p174
        %p524 = pneg %p198
        %p525 = pneg %p195
        %p526 = pneg %p219
        %p527 = pneg %p216
        %p528 = pneg %p240
        %p529 = pneg %p237
        %p530 = pneg %p261
        %p531 = pneg %p258
        %p532 = pneg %p282
        %p533 = pneg %p279
        %p534 = pneg %p303
        %p535 = pneg %p300
        %p536 = pneg %p329
        %p537 = pneg %p326
        %s538 = smul.u32 2, %s30
        %p539 = scmp.lt.s32.totalorder %s538, 3
        %s540 = scalar_select %p539, %s538, 3
        %s541 = smul.addr %s540, 8
        %s542 = scalar_lea.vmem %s13, %s541
        %s543 = smul.u32 2, %s30
        %s544 = smul.u32 2, %s30
        %p545 = scmp.lt.s32.totalorder %s544, 3
        %s546 = scalar_select %p545, %s544, 3
        %s547 = smul.addr %s546, 8
        %s548 = scalar_lea.vmem %s13, %s547
        %s549 = smul.u32 2, %s30
        %v552 = vld [vmem:[%s476] sm:$0xff]
        %v553 = vld [vmem:[%s476 + $0x8] sm:$0xff]
        %v554 = vpack.c.bf16 %v553, %v552
        %v555 = vld [vmem:[#allocation4] sm:$0xf]
        %v556 = vld [vmem:[#allocation4 + $0x4] sm:$0xf]
        %v557 = vld [vmem:[#allocation4 + $0x8] sm:$0xf]
        %v558 = vld [vmem:[#allocation4 + $0xc] sm:$0xf]
        %v559 = vld [vmem:[#allocation4 + $0x10] sm:$0xf]
        %v560 = vld [vmem:[#allocation4 + $0x14] sm:$0xf]
        %v561 = vld [vmem:[#allocation4 + $0x18] sm:$0xf]
        %v562 = vld [vmem:[#allocation4 + $0x1c] sm:$0xf]
        %v563 = vld [vmem:[#allocation4 + $0x20] sm:$0xf]
        %v564 = vld [vmem:[#allocation4 + $0x24] sm:$0xf]
        %v565 = vld [vmem:[#allocation4 + $0x28] sm:$0xf]
        %v566 = vld [vmem:[#allocation4 + $0x2c] sm:$0xf]
        %v567 = vld [vmem:[#allocation4 + $0x30] sm:$0xf]
        %v568 = vld [vmem:[#allocation4 + $0x34] sm:$0xf]
        %v569 = vld [vmem:[#allocation4 + $0x38] sm:$0xf]
        %v570 = vld [vmem:[#allocation4 + $0x3c] sm:$0xf]
        %v571 = vld [vmem:[%s2] sm:$0x1]
        %v573 = vlaneseq
        %v574 = vshrl.u32 %v573, 7
        %v575 = vsub.s32 0, %v574
        %v576 = vrot.slane %v571, %v575
        %v594 = vunpack.c.l.b16 %v555
        %v595 = vunpack.c.l.b16 %v556
        %v596 = vunpack.c.l.b16 %v557
        %v597 = vunpack.c.l.b16 %v558
        %v598 = vunpack.c.l.b16 %v559
        %v599 = vunpack.c.l.b16 %v560
        %v600 = vunpack.c.l.b16 %v561
        %v601 = vunpack.c.l.b16 %v562
        %v602 = vunpack.c.l.b16 %v563
        %v603 = vunpack.c.l.b16 %v564
        %v604 = vunpack.c.l.b16 %v565
        %v605 = vunpack.c.l.b16 %v566
        %v606 = vunpack.c.l.b16 %v567
        %v607 = vunpack.c.l.b16 %v568
        %v608 = vunpack.c.l.b16 %v569
        %v609 = vunpack.c.l.b16 %v570
        %v610 = vpack.c.b16 %v595, %v594
        %v611 = vpack.c.b16 %v597, %v596
        %v612 = vpack.c.b16 %v599, %v598
        %v613 = vpack.c.b16 %v601, %v600
        %v614 = vpack.c.b16 %v603, %v602
        %v615 = vpack.c.b16 %v605, %v604
        %v616 = vpack.c.b16 %v607, %v606
        %v617 = vpack.c.b16 %v609, %v608
        %626 = vmatprep.subr.bf16.mxu0 0
        %627 = vmatpush1.bf16.msra.mxu0 %v610
        %628 = vmatprep.subr.bf16.mxu0 0
        %629 = vmatpush1.bf16.msra.mxu0 %v611
        %630 = vmatprep.subr.bf16.mxu0 0
        %631 = vmatpush1.bf16.msra.mxu0 %v612
        %632 = vmatprep.subr.bf16.mxu0 0
        %633 = vmatpush1.bf16.msra.mxu0 %v613
        %634 = vmatprep.subr.bf16.mxu0 0
        %635 = vmatpush1.bf16.msra.mxu0 %v614
        %636 = vmatprep.subr.bf16.mxu0 0
        %637 = vmatpush1.bf16.msra.mxu0 %v615
        %638 = vmatprep.subr.bf16.mxu0 0
        %639 = vmatpush1.bf16.msra.mxu0 %v616
        %640 = vmatprep.subr.bf16.mxu0 0
        %641 = vmatpush1.bf16.msra.mxu0 %v617
        %642 = vmatprep.subr.bf16.mxu0 0
        %643 = vmatpush1.bf16.msra.mxu0 0
        %644 = vmatprep.subr.bf16.mxu0 0
        %645 = vmatpush1.bf16.msra.mxu0 0
        %646 = vmatprep.subr.bf16.mxu0 0
        %647 = vmatpush1.bf16.msra.mxu0 0
        %648 = vmatprep.subr.bf16.mxu0 0
        %649 = vmatpush1.bf16.msra.mxu0 0
        %650 = vmatprep.subr.bf16.mxu0 0
        %651 = vmatpush1.bf16.msra.mxu0 0
        %652 = vmatprep.subr.bf16.mxu0 0
        %653 = vmatpush1.bf16.msra.mxu0 0
        %654 = vmatprep.subr.bf16.mxu0 0
        %655 = vmatpush1.bf16.msra.mxu0 0
        %656 = vmatprep.subr.bf16.mxu0 0
        %657 = vmatpush1.bf16.msra.mxu0 0
        %658 = vmatprep.mubr.bf16.mxu0 0
        %659 = vmatmul.mubr.bf16.gmra.mrb[0].mxu0 %v554
        %v660 = vpop.f32.mrb[0].mxu0
        %v661 = vadd.f32 %v576, %v660
        %v662 = vpop.f32.mrb[0].mxu0
        %v663 = vpop.f32.mrb[0].mxu0
        %v664 = vadd.f32 %v576, %v663
        %v665 = vpop.f32.mrb[0].mxu0
        %666 = vdwg.mxu0
        %v667 = vpack.c.bf16 %v664, %v661
        %v668 = vmul.bf16 %v667, 1056980736
        %v669 = vtanh.bf16.pop %v668
        %v670 = vmul.bf16 %v669, 1056980736
        %v671 = vadd.bf16 %v670, 1056980736
        %v672 = vld [vmem:[#allocation6] sm:$0xf]
        %v673 = vld [vmem:[#allocation6 + $0x4] sm:$0xf]
        %v674 = vld [vmem:[#allocation6 + $0x8] sm:$0xf]
        %v675 = vld [vmem:[#allocation6 + $0xc] sm:$0xf]
        %v676 = vld [vmem:[#allocation6 + $0x10] sm:$0xf]
        %v677 = vld [vmem:[#allocation6 + $0x14] sm:$0xf]
        %v678 = vld [vmem:[#allocation6 + $0x18] sm:$0xf]
        %v679 = vld [vmem:[#allocation6 + $0x1c] sm:$0xf]
        %v680 = vld [vmem:[#allocation6 + $0x20] sm:$0xf]
        %v681 = vld [vmem:[#allocation6 + $0x24] sm:$0xf]
        %v682 = vld [vmem:[#allocation6 + $0x28] sm:$0xf]
        %v683 = vld [vmem:[#allocation6 + $0x2c] sm:$0xf]
        %v684 = vld [vmem:[#allocation6 + $0x30] sm:$0xf]
        %v685 = vld [vmem:[#allocation6 + $0x34] sm:$0xf]
        %v686 = vld [vmem:[#allocation6 + $0x38] sm:$0xf]
        %v687 = vld [vmem:[#allocation6 + $0x3c] sm:$0xf]
        %v688 = vld [vmem:[%s4] sm:$0x1]
        %v690 = vlaneseq
        %v691 = vshrl.u32 %v690, 7
        %v692 = vsub.s32 0, %v691
        %v693 = vrot.slane %v688, %v692
        %v711 = vunpack.c.l.b16 %v672
        %v712 = vunpack.c.l.b16 %v673
        %v713 = vunpack.c.l.b16 %v674
        %v714 = vunpack.c.l.b16 %v675
        %v715 = vunpack.c.l.b16 %v676
        %v716 = vunpack.c.l.b16 %v677
        %v717 = vunpack.c.l.b16 %v678
        %v718 = vunpack.c.l.b16 %v679
        %v719 = vunpack.c.l.b16 %v680
        %v720 = vunpack.c.l.b16 %v681
        %v721 = vunpack.c.l.b16 %v682
        %v722 = vunpack.c.l.b16 %v683
        %v723 = vunpack.c.l.b16 %v684
        %v724 = vunpack.c.l.b16 %v685
        %v725 = vunpack.c.l.b16 %v686
        %v726 = vunpack.c.l.b16 %v687
        %v727 = vpack.c.b16 %v712, %v711
        %v728 = vpack.c.b16 %v714, %v713
        %v729 = vpack.c.b16 %v716, %v715
        %v730 = vpack.c.b16 %v718, %v717
        %v731 = vpack.c.b16 %v720, %v719
        %v732 = vpack.c.b16 %v722, %v721
        %v733 = vpack.c.b16 %v724, %v723
        %v734 = vpack.c.b16 %v726, %v725
        %743 = vmatprep.subr.bf16.mxu0 0
        %744 = vmatpush1.bf16.msra.mxu0 %v727
        %745 = vmatprep.subr.bf16.mxu0 0
        %746 = vmatpush1.bf16.msra.mxu0 %v728
        %747 = vmatprep.subr.bf16.mxu0 0
        %748 = vmatpush1.bf16.msra.mxu0 %v729
        %749 = vmatprep.subr.bf16.mxu0 0
        %750 = vmatpush1.bf16.msra.mxu0 %v730
        %751 = vmatprep.subr.bf16.mxu0 0
        %752 = vmatpush1.bf16.msra.mxu0 %v731
        %753 = vmatprep.subr.bf16.mxu0 0
        %754 = vmatpush1.bf16.msra.mxu0 %v732
        %755 = vmatprep.subr.bf16.mxu0 0
        %756 = vmatpush1.bf16.msra.mxu0 %v733
        %757 = vmatprep.subr.bf16.mxu0 0
        %758 = vmatpush1.bf16.msra.mxu0 %v734
        %759 = vmatprep.subr.bf16.mxu0 0
        %760 = vmatpush1.bf16.msra.mxu0 0
        %761 = vmatprep.subr.bf16.mxu0 0
        %762 = vmatpush1.bf16.msra.mxu0 0
        %763 = vmatprep.subr.bf16.mxu0 0
        %764 = vmatpush1.bf16.msra.mxu0 0
        %765 = vmatprep.subr.bf16.mxu0 0
        %766 = vmatpush1.bf16.msra.mxu0 0
        %767 = vmatprep.subr.bf16.mxu0 0
        %768 = vmatpush1.bf16.msra.mxu0 0
        %769 = vmatprep.subr.bf16.mxu0 0
        %770 = vmatpush1.bf16.msra.mxu0 0
        %771 = vmatprep.subr.bf16.mxu0 0
        %772 = vmatpush1.bf16.msra.mxu0 0
        %773 = vmatprep.subr.bf16.mxu0 0
        %774 = vmatpush1.bf16.msra.mxu0 0
        %775 = vmatprep.mubr.bf16.mxu0 0
        %776 = vmatmul.mubr.bf16.gmra.mrb[0].mxu0 %v671
        %v777 = vpop.f32.mrb[0].mxu0
        %v778 = vadd.f32 %v693, %v777
        %v779 = vpop.f32.mrb[0].mxu0
        %v780 = vpop.f32.mrb[0].mxu0
        %v781 = vadd.f32 %v693, %v780
        %v782 = vpop.f32.mrb[0].mxu0
        %783 = vdwg.mxu0
        %v784 = vpack.c.bf16 %v781, %v778
        %v785 = vmul.bf16 %v784, 1056980736
        %v786 = vtanh.bf16.pop %v785
        %v787 = vmul.bf16 %v786, 1056980736
        %v788 = vadd.bf16 %v787, 1056980736
        %v789 = vld [vmem:[#allocation7] sm:$0xf]
        %v790 = vld [vmem:[#allocation7 + $0x4] sm:$0xf]
        %v791 = vld [vmem:[#allocation7 + $0x8] sm:$0xf]
        %v792 = vld [vmem:[#allocation7 + $0xc] sm:$0xf]
        %v793 = vld [vmem:[#allocation7 + $0x10] sm:$0xf]
        %v794 = vld [vmem:[#allocation7 + $0x14] sm:$0xf]
        %v795 = vld [vmem:[#allocation7 + $0x18] sm:$0xf]
        %v796 = vld [vmem:[#allocation7 + $0x1c] sm:$0xf]
        %v797 = vld [vmem:[#allocation7 + $0x20] sm:$0xf]
        %v798 = vld [vmem:[#allocation7 + $0x24] sm:$0xf]
        %v799 = vld [vmem:[#allocation7 + $0x28] sm:$0xf]
        %v800 = vld [vmem:[#allocation7 + $0x2c] sm:$0xf]
        %v801 = vld [vmem:[#allocation7 + $0x30] sm:$0xf]
        %v802 = vld [vmem:[#allocation7 + $0x34] sm:$0xf]
        %v803 = vld [vmem:[#allocation7 + $0x38] sm:$0xf]
        %v804 = vld [vmem:[#allocation7 + $0x3c] sm:$0xf]
        %v805 = vld [vmem:[%s6] sm:$0x1]
        %v807 = vlaneseq
        %v808 = vshrl.u32 %v807, 7
        %v809 = vsub.s32 0, %v808
        %v810 = vrot.slane %v805, %v809
        %v828 = vunpack.c.l.b16 %v789
        %v829 = vunpack.c.l.b16 %v790
        %v830 = vunpack.c.l.b16 %v791
        %v831 = vunpack.c.l.b16 %v792
        %v832 = vunpack.c.l.b16 %v793
        %v833 = vunpack.c.l.b16 %v794
        %v834 = vunpack.c.l.b16 %v795
        %v835 = vunpack.c.l.b16 %v796
        %v836 = vunpack.c.l.b16 %v797
        %v837 = vunpack.c.l.b16 %v798
        %v838 = vunpack.c.l.b16 %v799
        %v839 = vunpack.c.l.b16 %v800
        %v840 = vunpack.c.l.b16 %v801
        %v841 = vunpack.c.l.b16 %v802
        %v842 = vunpack.c.l.b16 %v803
        %v843 = vunpack.c.l.b16 %v804
        %v844 = vpack.c.b16 %v829, %v828
        %v845 = vpack.c.b16 %v831, %v830
        %v846 = vpack.c.b16 %v833, %v832
        %v847 = vpack.c.b16 %v835, %v834
        %v848 = vpack.c.b16 %v837, %v836
        %v849 = vpack.c.b16 %v839, %v838
        %v850 = vpack.c.b16 %v841, %v840
        %v851 = vpack.c.b16 %v843, %v842
        %860 = vmatprep.subr.bf16.mxu0 0
        %861 = vmatpush1.bf16.msra.mxu0 %v844
        %862 = vmatprep.subr.bf16.mxu0 0
        %863 = vmatpush1.bf16.msra.mxu0 %v845
        %864 = vmatprep.subr.bf16.mxu0 0
        %865 = vmatpush1.bf16.msra.mxu0 %v846
        %866 = vmatprep.subr.bf16.mxu0 0
        %867 = vmatpush1.bf16.msra.mxu0 %v847
        %868 = vmatprep.subr.bf16.mxu0 0
        %869 = vmatpush1.bf16.msra.mxu0 %v848
        %870 = vmatprep.subr.bf16.mxu0 0
        %871 = vmatpush1.bf16.msra.mxu0 %v849
        %872 = vmatprep.subr.bf16.mxu0 0
        %873 = vmatpush1.bf16.msra.mxu0 %v850
        %874 = vmatprep.subr.bf16.mxu0 0
        %875 = vmatpush1.bf16.msra.mxu0 %v851
        %876 = vmatprep.subr.bf16.mxu0 0
        %877 = vmatpush1.bf16.msra.mxu0 0
        %878 = vmatprep.subr.bf16.mxu0 0
        %879 = vmatpush1.bf16.msra.mxu0 0
        %880 = vmatprep.subr.bf16.mxu0 0
        %881 = vmatpush1.bf16.msra.mxu0 0
        %882 = vmatprep.subr.bf16.mxu0 0
        %883 = vmatpush1.bf16.msra.mxu0 0
        %884 = vmatprep.subr.bf16.mxu0 0
        %885 = vmatpush1.bf16.msra.mxu0 0
        %886 = vmatprep.subr.bf16.mxu0 0
        %887 = vmatpush1.bf16.msra.mxu0 0
        %888 = vmatprep.subr.bf16.mxu0 0
        %889 = vmatpush1.bf16.msra.mxu0 0
        %890 = vmatprep.subr.bf16.mxu0 0
        %891 = vmatpush1.bf16.msra.mxu0 0
        %892 = vmatprep.mubr.bf16.mxu0 0
        %893 = vmatmul.mubr.bf16.gmra.mrb[0].mxu0 %v788
        %v894 = vpop.f32.mrb[0].mxu0
        %v895 = vadd.f32 %v810, %v894
        %v896 = vpop.f32.mrb[0].mxu0
        %v897 = vpop.f32.mrb[0].mxu0
        %v898 = vadd.f32 %v810, %v897
        %v899 = vpop.f32.mrb[0].mxu0
        %900 = vdwg.mxu0
        %v901 = vpack.c.bf16 %v898, %v895
        %v902 = vmul.bf16 %v901, 1056980736
        %v903 = vtanh.bf16.pop %v902
        %v904 = vmul.bf16 %v903, 1056980736
        %v905 = vadd.bf16 %v904, 1056980736
        %v906 = vld [vmem:[#allocation9] sm:$0xf]
        %v907 = vld [vmem:[#allocation9 + $0x4] sm:$0xf]
        %v908 = vld [vmem:[#allocation9 + $0x8] sm:$0xf]
        %v909 = vld [vmem:[#allocation9 + $0xc] sm:$0xf]
        %v910 = vld [vmem:[#allocation9 + $0x10] sm:$0xf]
        %v911 = vld [vmem:[#allocation9 + $0x14] sm:$0xf]
        %v912 = vld [vmem:[#allocation9 + $0x18] sm:$0xf]
        %v913 = vld [vmem:[#allocation9 + $0x1c] sm:$0xf]
        %v914 = vld [vmem:[#allocation9 + $0x20] sm:$0xf]
        %v915 = vld [vmem:[#allocation9 + $0x24] sm:$0xf]
        %v916 = vld [vmem:[#allocation9 + $0x28] sm:$0xf]
        %v917 = vld [vmem:[#allocation9 + $0x2c] sm:$0xf]
        %v918 = vld [vmem:[#allocation9 + $0x30] sm:$0xf]
        %v919 = vld [vmem:[#allocation9 + $0x34] sm:$0xf]
        %v920 = vld [vmem:[#allocation9 + $0x38] sm:$0xf]
        %v921 = vld [vmem:[#allocation9 + $0x3c] sm:$0xf]
        %v922 = vld [vmem:[%s8] sm:$0x1]
        %v924 = vlaneseq
        %v925 = vshrl.u32 %v924, 7
        %v926 = vsub.s32 0, %v925
        %v927 = vrot.slane %v922, %v926
        %v945 = vunpack.c.l.b16 %v906
        %v946 = vunpack.c.l.b16 %v907
        %v947 = vunpack.c.l.b16 %v908
        %v948 = vunpack.c.l.b16 %v909
        %v949 = vunpack.c.l.b16 %v910
        %v950 = vunpack.c.l.b16 %v911
        %v951 = vunpack.c.l.b16 %v912
        %v952 = vunpack.c.l.b16 %v913
        %v953 = vunpack.c.l.b16 %v914
        %v954 = vunpack.c.l.b16 %v915
        %v955 = vunpack.c.l.b16 %v916
        %v956 = vunpack.c.l.b16 %v917
        %v957 = vunpack.c.l.b16 %v918
        %v958 = vunpack.c.l.b16 %v919
        %v959 = vunpack.c.l.b16 %v920
        %v960 = vunpack.c.l.b16 %v921
        %v961 = vpack.c.b16 %v946, %v945
        %v962 = vpack.c.b16 %v948, %v947
        %v963 = vpack.c.b16 %v950, %v949
        %v964 = vpack.c.b16 %v952, %v951
        %v965 = vpack.c.b16 %v954, %v953
        %v966 = vpack.c.b16 %v956, %v955
        %v967 = vpack.c.b16 %v958, %v957
        %v968 = vpack.c.b16 %v960, %v959
        %977 = vmatprep.subr.bf16.mxu0 0
        %978 = vmatpush1.bf16.msra.mxu0 %v961
        %979 = vmatprep.subr.bf16.mxu0 0
        %980 = vmatpush1.bf16.msra.mxu0 %v962
        %981 = vmatprep.subr.bf16.mxu0 0
        %982 = vmatpush1.bf16.msra.mxu0 %v963
        %983 = vmatprep.subr.bf16.mxu0 0
        %984 = vmatpush1.bf16.msra.mxu0 %v964
        %985 = vmatprep.subr.bf16.mxu0 0
        %986 = vmatpush1.bf16.msra.mxu0 %v965
        %987 = vmatprep.subr.bf16.mxu0 0
        %988 = vmatpush1.bf16.msra.mxu0 %v966
        %989 = vmatprep.subr.bf16.mxu0 0
        %990 = vmatpush1.bf16.msra.mxu0 %v967
        %991 = vmatprep.subr.bf16.mxu0 0
        %992 = vmatpush1.bf16.msra.mxu0 %v968
        %993 = vmatprep.subr.bf16.mxu0 0
        %994 = vmatpush1.bf16.msra.mxu0 0
        %995 = vmatprep.subr.bf16.mxu0 0
        %996 = vmatpush1.bf16.msra.mxu0 0
        %997 = vmatprep.subr.bf16.mxu0 0
        %998 = vmatpush1.bf16.msra.mxu0 0
        %999 = vmatprep.subr.bf16.mxu0 0
        %1000 = vmatpush1.bf16.msra.mxu0 0
        %1001 = vmatprep.subr.bf16.mxu0 0
        %1002 = vmatpush1.bf16.msra.mxu0 0
        %1003 = vmatprep.subr.bf16.mxu0 0
        %1004 = vmatpush1.bf16.msra.mxu0 0
        %1005 = vmatprep.subr.bf16.mxu0 0
        %1006 = vmatpush1.bf16.msra.mxu0 0
        %1007 = vmatprep.subr.bf16.mxu0 0
        %1008 = vmatpush1.bf16.msra.mxu0 0
        %1009 = vmatprep.mubr.bf16.mxu0 0
        %1010 = vmatmul.mubr.bf16.gmra.mrb[0].mxu0 %v905
        %v1011 = vpop.f32.mrb[0].mxu0
        %v1012 = vadd.f32 %v927, %v1011
        %v1013 = vpop.f32.mrb[0].mxu0
        %v1014 = vpop.f32.mrb[0].mxu0
        %v1015 = vadd.f32 %v927, %v1014
        %v1016 = vpop.f32.mrb[0].mxu0
        %1017 = vdwg.mxu0
        %v1018 = vpack.c.bf16 %v1015, %v1012
        %v1019 = vmul.bf16 %v1018, 1056980736
        %v1020 = vtanh.bf16.pop %v1019
        %v1021 = vmul.bf16 %v1020, 1056980736
        %v1022 = vadd.bf16 %v1021, 1056980736
        %v1023 = vld [vmem:[#allocation10] sm:$0xf]
        %v1024 = vld [vmem:[#allocation10 + $0x4] sm:$0xf]
        %v1025 = vld [vmem:[#allocation10 + $0x8] sm:$0xf]
        %v1026 = vld [vmem:[#allocation10 + $0xc] sm:$0xf]
        %v1027 = vld [vmem:[#allocation10 + $0x10] sm:$0xf]
        %v1028 = vld [vmem:[#allocation10 + $0x14] sm:$0xf]
        %v1029 = vld [vmem:[#allocation10 + $0x18] sm:$0xf]
        %v1030 = vld [vmem:[#allocation10 + $0x1c] sm:$0xf]
        %v1031 = vld [vmem:[#allocation10 + $0x20] sm:$0xf]
        %v1032 = vld [vmem:[#allocation10 + $0x24] sm:$0xf]
        %v1033 = vld [vmem:[#allocation10 + $0x28] sm:$0xf]
        %v1034 = vld [vmem:[#allocation10 + $0x2c] sm:$0xf]
        %v1035 = vld [vmem:[#allocation10 + $0x30] sm:$0xf]
        %v1036 = vld [vmem:[#allocation10 + $0x34] sm:$0xf]
        %v1037 = vld [vmem:[#allocation10 + $0x38] sm:$0xf]
        %v1038 = vld [vmem:[#allocation10 + $0x3c] sm:$0xf]
        %v1039 = vld [vmem:[%s10] sm:$0x1]
        %v1041 = vlaneseq
        %v1042 = vshrl.u32 %v1041, 7
        %v1043 = vsub.s32 0, %v1042
        %v1044 = vrot.slane %v1039, %v1043
        %v1062 = vunpack.c.l.b16 %v1023
        %v1063 = vunpack.c.l.b16 %v1024
        %v1064 = vunpack.c.l.b16 %v1025
        %v1065 = vunpack.c.l.b16 %v1026
        %v1066 = vunpack.c.l.b16 %v1027
        %v1067 = vunpack.c.l.b16 %v1028
        %v1068 = vunpack.c.l.b16 %v1029
        %v1069 = vunpack.c.l.b16 %v1030
        %v1070 = vunpack.c.l.b16 %v1031
        %v1071 = vunpack.c.l.b16 %v1032
        %v1072 = vunpack.c.l.b16 %v1033
        %v1073 = vunpack.c.l.b16 %v1034
        %v1074 = vunpack.c.l.b16 %v1035
        %v1075 = vunpack.c.l.b16 %v1036
        %v1076 = vunpack.c.l.b16 %v1037
        %v1077 = vunpack.c.l.b16 %v1038
        %v1078 = vpack.c.b16 %v1063, %v1062
        %v1079 = vpack.c.b16 %v1065, %v1064
        %v1080 = vpack.c.b16 %v1067, %v1066
        %v1081 = vpack.c.b16 %v1069, %v1068
        %v1082 = vpack.c.b16 %v1071, %v1070
        %v1083 = vpack.c.b16 %v1073, %v1072
        %v1084 = vpack.c.b16 %v1075, %v1074
        %v1085 = vpack.c.b16 %v1077, %v1076
        %1094 = vmatprep.subr.bf16.mxu0 0
        %1095 = vmatpush1.bf16.msra.mxu0 %v1078
        %1096 = vmatprep.subr.bf16.mxu0 0
        %1097 = vmatpush1.bf16.msra.mxu0 %v1079
        %1098 = vmatprep.subr.bf16.mxu0 0
        %1099 = vmatpush1.bf16.msra.mxu0 %v1080
        %1100 = vmatprep.subr.bf16.mxu0 0
        %1101 = vmatpush1.bf16.msra.mxu0 %v1081
        %1102 = vmatprep.subr.bf16.mxu0 0
        %1103 = vmatpush1.bf16.msra.mxu0 %v1082
        %1104 = vmatprep.subr.bf16.mxu0 0
        %1105 = vmatpush1.bf16.msra.mxu0 %v1083
        %1106 = vmatprep.subr.bf16.mxu0 0
        %1107 = vmatpush1.bf16.msra.mxu0 %v1084
        %1108 = vmatprep.subr.bf16.mxu0 0
        %1109 = vmatpush1.bf16.msra.mxu0 %v1085
        %1110 = vmatprep.subr.bf16.mxu0 0
        %1111 = vmatpush1.bf16.msra.mxu0 0
        %1112 = vmatprep.subr.bf16.mxu0 0
        %1113 = vmatpush1.bf16.msra.mxu0 0
        %1114 = vmatprep.subr.bf16.mxu0 0
        %1115 = vmatpush1.bf16.msra.mxu0 0
        %1116 = vmatprep.subr.bf16.mxu0 0
        %1117 = vmatpush1.bf16.msra.mxu0 0
        %1118 = vmatprep.subr.bf16.mxu0 0
        %1119 = vmatpush1.bf16.msra.mxu0 0
        %1120 = vmatprep.subr.bf16.mxu0 0
        %1121 = vmatpush1.bf16.msra.mxu0 0
        %1122 = vmatprep.subr.bf16.mxu0 0
        %1123 = vmatpush1.bf16.msra.mxu0 0
        %1124 = vmatprep.subr.bf16.mxu0 0
        %1125 = vmatpush1.bf16.msra.mxu0 0
        %1126 = vmatprep.mubr.bf16.mxu0 0
        %1127 = vmatmul.mubr.bf16.gmra.mrb[0].mxu0 %v1022
        %v1128 = vpop.f32.mrb[0].mxu0
        %v1129 = vadd.f32 %v1044, %v1128
        %v1130 = vpop.f32.mrb[0].mxu0
        %v1131 = vpop.f32.mrb[0].mxu0
        %v1132 = vadd.f32 %v1044, %v1131
        %v1133 = vpop.f32.mrb[0].mxu0
        %1134 = vdwg.mxu0
        %v1135 = vpack.c.bf16 %v1132, %v1129
        %v1136 = vmul.bf16 %v1135, 1056980736
        %v1137 = vtanh.bf16.pop %v1136
        %v1138 = vmul.bf16 %v1137, 1056980736
        %v1139 = vadd.bf16 %v1138, 1056980736
        %v1140 = vld [vmem:[#allocation12] sm:$0xf]
        %v1141 = vld [vmem:[#allocation12 + $0x4] sm:$0xf]
        %v1142 = vld [vmem:[#allocation12 + $0x8] sm:$0xf]
        %v1143 = vld [vmem:[#allocation12 + $0xc] sm:$0xf]
        %v1144 = vld [vmem:[#allocation12 + $0x10] sm:$0xf]
        %v1145 = vld [vmem:[#allocation12 + $0x14] sm:$0xf]
        %v1146 = vld [vmem:[#allocation12 + $0x18] sm:$0xf]
        %v1147 = vld [vmem:[#allocation12 + $0x1c] sm:$0xf]
        %v1148 = vld [vmem:[#allocation12 + $0x20] sm:$0xf]
        %v1149 = vld [vmem:[#allocation12 + $0x24] sm:$0xf]
        %v1150 = vld [vmem:[#allocation12 + $0x28] sm:$0xf]
        %v1151 = vld [vmem:[#allocation12 + $0x2c] sm:$0xf]
        %v1152 = vld [vmem:[#allocation12 + $0x30] sm:$0xf]
        %v1153 = vld [vmem:[#allocation12 + $0x34] sm:$0xf]
        %v1154 = vld [vmem:[#allocation12 + $0x38] sm:$0xf]
        %v1155 = vld [vmem:[#allocation12 + $0x3c] sm:$0xf]
        %v1156 = vld [vmem:[%s12] sm:$0x1]
        %v1158 = vlaneseq
        %v1159 = vshrl.u32 %v1158, 7
        %v1160 = vsub.s32 0, %v1159
        %v1161 = vrot.slane %v1156, %v1160
        %v1179 = vunpack.c.l.b16 %v1140
        %v1180 = vunpack.c.l.b16 %v1141
        %v1181 = vunpack.c.l.b16 %v1142
        %v1182 = vunpack.c.l.b16 %v1143
        %v1183 = vunpack.c.l.b16 %v1144
        %v1184 = vunpack.c.l.b16 %v1145
        %v1185 = vunpack.c.l.b16 %v1146
        %v1186 = vunpack.c.l.b16 %v1147
        %v1187 = vunpack.c.l.b16 %v1148
        %v1188 = vunpack.c.l.b16 %v1149
        %v1189 = vunpack.c.l.b16 %v1150
        %v1190 = vunpack.c.l.b16 %v1151
        %v1191 = vunpack.c.l.b16 %v1152
        %v1192 = vunpack.c.l.b16 %v1153
        %v1193 = vunpack.c.l.b16 %v1154
        %v1194 = vunpack.c.l.b16 %v1155
        %v1195 = vpack.c.b16 %v1180, %v1179
        %v1196 = vpack.c.b16 %v1182, %v1181
        %v1197 = vpack.c.b16 %v1184, %v1183
        %v1198 = vpack.c.b16 %v1186, %v1185
        %v1199 = vpack.c.b16 %v1188, %v1187
        %v1200 = vpack.c.b16 %v1190, %v1189
        %v1201 = vpack.c.b16 %v1192, %v1191
        %v1202 = vpack.c.b16 %v1194, %v1193
        %1211 = vmatprep.subr.bf16.mxu0 0
        %1212 = vmatpush1.bf16.msra.mxu0 %v1195
        %1213 = vmatprep.subr.bf16.mxu0 0
        %1214 = vmatpush1.bf16.msra.mxu0 %v1196
        %1215 = vmatprep.subr.bf16.mxu0 0
        %1216 = vmatpush1.bf16.msra.mxu0 %v1197
        %1217 = vmatprep.subr.bf16.mxu0 0
        %1218 = vmatpush1.bf16.msra.mxu0 %v1198
        %1219 = vmatprep.subr.bf16.mxu0 0
        %1220 = vmatpush1.bf16.msra.mxu0 %v1199
        %1221 = vmatprep.subr.bf16.mxu0 0
        %1222 = vmatpush1.bf16.msra.mxu0 %v1200
        %1223 = vmatprep.subr.bf16.mxu0 0
        %1224 = vmatpush1.bf16.msra.mxu0 %v1201
        %1225 = vmatprep.subr.bf16.mxu0 0
        %1226 = vmatpush1.bf16.msra.mxu0 %v1202
        %1227 = vmatprep.subr.bf16.mxu0 0
        %1228 = vmatpush1.bf16.msra.mxu0 0
        %1229 = vmatprep.subr.bf16.mxu0 0
        %1230 = vmatpush1.bf16.msra.mxu0 0
        %1231 = vmatprep.subr.bf16.mxu0 0
        %1232 = vmatpush1.bf16.msra.mxu0 0
        %1233 = vmatprep.subr.bf16.mxu0 0
        %1234 = vmatpush1.bf16.msra.mxu0 0
        %1235 = vmatprep.subr.bf16.mxu0 0
        %1236 = vmatpush1.bf16.msra.mxu0 0
        %1237 = vmatprep.subr.bf16.mxu0 0
        %1238 = vmatpush1.bf16.msra.mxu0 0
        %1239 = vmatprep.subr.bf16.mxu0 0
        %1240 = vmatpush1.bf16.msra.mxu0 0
        %1241 = vmatprep.subr.bf16.mxu0 0
        %1242 = vmatpush1.bf16.msra.mxu0 0
        %1243 = vmatprep.mubr.bf16.mxu0 0
        %1244 = vmatmul.mubr.bf16.gmra.mrb[0].mxu0 %v1139
        %v1245 = vpop.f32.mrb[0].mxu0
        %v1246 = vadd.f32 %v1161, %v1245
        %v1247 = vpop.f32.mrb[0].mxu0
        %v1248 = vpop.f32.mrb[0].mxu0
        %v1249 = vadd.f32 %v1161, %v1248
        %v1250 = vpop.f32.mrb[0].mxu0
        %1251 = vdwg.mxu0
        %v1252 = vmul.f32 %v1246, 0.5
        %v1253 = vmul.f32 %v1249, 0.5
        %v1254 = vtanh.pop %v1252
        %v1255 = vtanh.pop %v1253
        %v1256 = vmul.f32 %v1254, 0.5
        %v1257 = vmul.f32 %v1255, 0.5
        %v1258 = vadd.f32 %v1256, 0.5
        %v1259 = vadd.f32 %v1257, 0.5
        %v1260 = vsub.f32 %v1258, %v552
        %v1261 = vsub.f32 %v1259, %v553
        %v1262 = vlaneseq
        %v1263 = vand.u32 %v1262, 127
        %vm1264 = vcmp.lt.s32.totalorder %v1263, 16
        %v1265 = vsel %vm1264, %v1260, 0.0
        %v1266 = vsel %vm1264, %v1261, 0.0
        %v1267 = vmul.f32 %v1265, %v1265
        %v1268 = vmul.f32 %v1266, %v1266
        %1269 = vadd.xlane.f32.xlu0 %v1267
        %v1270 = vpop.xlane.xlu0 %1269
        %1271 = vadd.xlane.f32.xlu0 %v1268
        %v1272 = vpop.xlane.xlu0 %1271
        %v1273 = vadd.f32 %v1270, 0.0
        %v1274 = vadd.f32 %v1272, 0.0
        %v1275 = vmul.f32 %v1273, 0.0625
        %v1276 = vmul.f32 %v1274, 0.0625
        %vm1277 = vcmask 7168
        %1278 = vst.msk [vmem:[%s548] sm:$0xff] %vm1277, %v1275
        %1279 = vst.msk [vmem:[%s548 + $0x8] sm:$0xff] %vm1277, %v1276
        %s1280 = smul.u32 2, %s30
        %p1281 = scmp.lt.s32.totalorder %s1280, 3
        %s1282 = scalar_select %p1281, %s1280, 3
        %s1283 = smul.addr %s1282, 8
        %s1284 = scalar_lea.vmem %s13, %s1283
        // Predicated region
        $region101: #{tpu_custom_call.1} parent=71 // pred_check
          %p1285 = pneg %p326
        $region102: #{tpu_custom_call.1} parent=71 // pred_check_branch
          %1287 = sbr.rel (%p1285) target = $region104
        $region103: #{tpu_custom_call.1} parent=71 // pred_region
          %s1288 = smul.u32 2, %s30
        $region104: #{tpu_custom_call.1} parent=71 // pred_fallthru
          _
      $region72: #{tpu_custom_call.1} parent=5 // pred_fallthru
        _
      %p1289 = scmp.le.s32.totalorder 2, %s25
      // Predicated region
      $region105: #{tpu_custom_call.1} parent=5 // pred_check
        %p1290 = pneg %p1289
      $region106: #{tpu_custom_call.1} parent=5 // pred_check_branch
        %1292 = sbr.rel (%p1290) target = $region108
      $region107: #{tpu_custom_call.1} parent=5 // pred_region
        %s1293 = ssub.s32 %s25, 2
        // Predicated region
        $region109: #{tpu_custom_call.1} parent=107 // pred_check
          %p1294 = pneg %p332
        $region110: #{tpu_custom_call.1} parent=107 // pred_check_branch
          %1296 = sbr.rel (%p1294) target = $region112
        $region111: #{tpu_custom_call.1} parent=107 // pred_region
          %s1297 = smul.u32 2, %s31
          %p1298 = scmp.lt.s32.totalorder %s1297, 3
          %s1299 = scalar_select %p1298, %s1297, 3
          %s1300 = smul.addr %s1299, 8
          %s1301 = scalar_lea.vmem %s13, %s1300
        $region112: #{tpu_custom_call.1} parent=107 // pred_fallthru
          _
      $region108: #{tpu_custom_call.1} parent=5 // pred_fallthru
        _
    $region6: #{tpu_custom_call.1} parent=1 // loop_footer
      %s29 = sadd.s32 1, %s25
    $region7: #{tpu_custom_call.1} parent=1 // loop_footer_branch
      %24 = sbr.rel target = $region3
    $region8: #{tpu_custom_call.1} parent=1 // loop_exit
      _
    %1302 = vsyncpa [#allocation3], 1
    %s1303 = scalar_lea.sflag [#allocation3], 1
    %1304 = vsyncpa %s1303, 1
    %1305 = vsyncpa [#allocation5], 1
    %1306 = vsyncpa [#allocation8], 1
    %1307 = vsyncpa [#allocation11], 1

</llo_original>
